<compile_context>
chip_gen: v6e
topology: v6e:2x2x1
jax: 0.10.0
libtpu: 0.0.40
codegen_flags: <defaults>
</compile_context>

<pallas_src>
import functools

import jax
import jax.numpy as jnp
from jax.experimental import pallas as pl
from jax.experimental.pallas import tpu as pltpu

NEG_SLOPE = 0.2


def _pick_tile(L, max_tile):
    for cand in (2048, 1024, 512, 256, 128, 64, 32, 16, 8):
        if cand <= max_tile and L % cand == 0:
            return cand
    return L


def _dilated_block_kernel(x_hbm, w1_ref, b1_ref, w2_ref, b2_ref, o_ref,
                          xbuf, sems, *, d, TL, nT, C):
    """x_hbm: (B, L, C) f32 in HBM.  w1_ref: (3C, C) bf16.  w2_ref: (C, C) bf16.
    b1_ref/b2_ref: (1, C) f32.  o_ref block: (1, TL, C) f32.
    xbuf: (2, TL + 2d, C) f32 double-buffered halo window.  sems: (2, 3) DMA."""
    b = pl.program_id(0)
    t = pl.program_id(1)
    slot = t & 1
    nslot = 1 - slot

    def copies(tile_idx, slot_idx):
        base = tile_idx * TL
        center = pltpu.make_async_copy(
            x_hbm.at[b, pl.ds(base, TL), :],
            xbuf.at[slot_idx, pl.ds(d, TL), :],
            sems.at[slot_idx, 0])
        left = pltpu.make_async_copy(
            x_hbm.at[b, pl.ds(base - d, d), :],
            xbuf.at[slot_idx, pl.ds(0, d), :],
            sems.at[slot_idx, 1])
        right = pltpu.make_async_copy(
            x_hbm.at[b, pl.ds(base + TL, d), :],
            xbuf.at[slot_idx, pl.ds(TL + d, d), :],
            sems.at[slot_idx, 2])
        return center, left, right

    def start(tile_idx, slot_idx):
        center, left, right = copies(tile_idx, slot_idx)
        center.start()

        @pl.when(tile_idx > 0)            # left halo exists
        def _():
            left.start()

        @pl.when(tile_idx < nT - 1)       # right halo exists
        def _():
            right.start()

    def wait(tile_idx, slot_idx):
        center, left, right = copies(tile_idx, slot_idx)
        center.wait()

        @pl.when(tile_idx > 0)
        def _():
            left.wait()

        @pl.when(tile_idx < nT - 1)
        def _():
            right.wait()

    # Prime the pipeline at the first tile of each batch row.
    @pl.when(t == 0)
    def _():
        start(t, 0)                       # t == 0 here

    # Prefetch tile t+1 into the other slot while we compute on this one.
    @pl.when(t + 1 < nT)
    def _():
        start(t + 1, nslot)

    # Wait only for the current tile's window.
    wait(t, slot)

    # Zero-padding semantics at the sequence boundaries (no padded HBM copy).
    @pl.when(t == 0)
    def _():
        xbuf[slot, pl.ds(0, d), :] = jnp.zeros((d, C), jnp.float32)

    @pl.when(t == nT - 1)
    def _():
        xbuf[slot, pl.ds(TL + d, d), :] = jnp.zeros((d, C), jnp.float32)

    # window row j holds x[t*TL - d + j]; output row i needs rows i, i+d, i+2d.
    x_l = xbuf[slot, pl.ds(0, TL), :]          # x[t*TL + i - d]
    x_m = xbuf[slot, pl.ds(d, TL), :]          # x[t*TL + i]      (also residual)
    x_r = xbuf[slot, pl.ds(2 * d, TL), :]      # x[t*TL + i + d]

    # Pack the 3 taps into one (TL, 3C) @ (3C, C) bf16 matmul, f32 accumulate.
    xcat = jnp.concatenate(
        [x_l.astype(jnp.bfloat16),
         x_m.astype(jnp.bfloat16),
         x_r.astype(jnp.bfloat16)], axis=-1)

    h = jnp.dot(xcat, w1_ref[...], preferred_element_type=jnp.float32)
    h = h + b1_ref[...]

    y = jnp.dot(h.astype(jnp.bfloat16), w2_ref[...],
                preferred_element_type=jnp.float32)
    y = y + b2_ref[...] + x_m
    y = jnp.where(y >= 0, y, NEG_SLOPE * y)

    o_ref[0] = y.astype(o_ref.dtype)


def dilated_block(x_ncl, w1, b1, w2, b2, dilation, *, max_tile=2048):
    """x_ncl: (B, C, L) f32 (PyTorch NCL).  w1: (3, C, C) so that
    h[t] = sum_k x[t + (k-1)*d] @ w1[k] + b1 (== Conv1d(C,C,3,pad=d,dil=d)).
    w2: (C, C), b1/b2: (C,).  Returns (B, C, L) f32."""
    B, C, L = x_ncl.shape
    d = int(dilation)
    x = jnp.transpose(x_ncl, (0, 2, 1))                  # (B, L, C)

    TL = _pick_tile(L, max_tile)
    assert L % TL == 0
    nT = L // TL
    assert 1 <= d <= TL, "dilation must not exceed the time tile"
    WIN = TL + 2 * d

    w1r = w1.reshape(3 * C, C).astype(jnp.bfloat16)      # taps stacked on K dim
    w2b = w2.astype(jnp.bfloat16)
    b1r = b1.reshape(1, C).astype(jnp.float32)
    b2r = b2.reshape(1, C).astype(jnp.float32)

    kernel = functools.partial(_dilated_block_kernel, d=d, TL=TL, nT=nT, C=C)

    out = pl.pallas_call(
        kernel,
        out_shape=jax.ShapeDtypeStruct((B, L, C), jnp.float32),
        grid_spec=pltpu.PrefetchScalarGridSpec(
            num_scalar_prefetch=0,
            grid=(B, nT),
            in_specs=[
                pl.BlockSpec(memory_space=pl.ANY),                   # x in HBM
                pl.BlockSpec((3 * C, C), lambda b, t: (0, 0)),       # w1 (resident)
                pl.BlockSpec((1, C), lambda b, t: (0, 0)),           # b1
                pl.BlockSpec((C, C), lambda b, t: (0, 0)),           # w2
                pl.BlockSpec((1, C), lambda b, t: (0, 0)),           # b2
            ],
            out_specs=pl.BlockSpec((1, TL, C), lambda b, t: (b, t, 0)),
            scratch_shapes=[
                pltpu.VMEM((2, WIN, C), jnp.float32),                # double buffer
                pltpu.SemaphoreType.DMA((2, 3)),                     # [slot, which]
            ],
        ),
        compiler_params=pltpu.CompilerParams(
            # t must stay sequential (cross-iteration prefetch); b uses megacore.
            dimension_semantics=("parallel", "arbitrary"),
            vmem_limit_bytes=32 * 1024 * 1024,
        ),
    )(x, w1r, b1r, w2b, b2r)

    return jnp.transpose(out, (0, 2, 1))                 # back to (B, C, L)


# -------------------- pure-JAX f32 reference (for validation) ---------------
def reference(x_ncl, w1, b1, w2, b2, dilation):
    x = jnp.transpose(x_ncl, (0, 2, 1))                  # (B, L, C)
    B, L, C = x.shape
    d = int(dilation)
    xp = jnp.pad(x, ((0, 0), (d, d), (0, 0)))
    h = b1.reshape(1, 1, C)
    for k in range(3):
        h = h + jnp.einsum('blc,cd->bld', xp[:, k * d:k * d + L, :], w1[k])
    y = jnp.einsum('blc,cd->bld', h, w2) + b2.reshape(1, 1, C) + x
    y = jnp.where(y >= 0, y, NEG_SLOPE * y)
    return jnp.transpose(y, (0, 2, 1))


# ----------------------------------------------------------------------------
if __name__ == "__main__":
    B, C, L = 2, 128, 512        # channels = latent_dim of the parent Generator
    dilation = 3

    key = jax.random.PRNGKey(0)
    k_x, k_w1, k_b1, k_w2, k_b2 = jax.random.split(key, 5)
    x = jax.random.normal(k_x, (B, C, L), jnp.float32)
    w1 = jax.random.uniform(k_w1, (3, C, C), jnp.float32, -0.05, 0.05)
    b1 = jax.random.uniform(k_b1, (C,), jnp.float32, -0.05, 0.05)
    w2 = jax.random.uniform(k_w2, (C, C), jnp.float32, -0.05, 0.05)
    b2 = jax.random.uniform(k_b2, (C,), jnp.float32, -0.05, 0.05)

    ref = reference(x, w1, b1, w2, b2, dilation)

    # (a) tiled path: TL=128 -> 4 time tiles per batch row; exercises the
    #     double-buffered prefetch, both halo DMAs and both boundary zero-fills.
    fwd_tiled = jax.jit(functools.partial(dilated_block, dilation=dilation,
                                          max_tile=128))
    out_tiled = jax.block_until_ready(fwd_tiled(x, w1, b1, w2, b2))

    # (b) default path: biggest tile that divides L (single tile here).
    fwd_big = jax.jit(functools.partial(dilated_block, dilation=dilation))
    out_big = jax.block_until_ready(fwd_big(x, w1, b1, w2, b2))

    for out in (out_tiled, out_big):
        assert out.shape == (B, C, L), out.shape
        assert out.dtype == jnp.float32
        assert bool(jnp.all(jnp.isfinite(out)))
        err = float(jnp.max(jnp.abs(out - ref)))
        assert err < 3e-2, f"max abs error vs f32 reference too large: {err}"

    print("KERNEL_OK")
</pallas_src>

<mosaic_0001>
module attributes {stable_mosaic.version = 11 : i64} {
  func.func @_dilated_block_kernel(%arg0: i32, %arg1: i32, %arg2: memref<2x512x128xf32, #tpu.memory_space<any>>, %arg3: memref<384x128xbf16, #tpu.memory_space<vmem>>, %arg4: memref<1x128xf32, #tpu.memory_space<vmem>>, %arg5: memref<128x128xbf16, #tpu.memory_space<vmem>>, %arg6: memref<1x128xf32, #tpu.memory_space<vmem>>, %arg7: memref<1x128x128xf32, #tpu.memory_space<vmem>>, %arg8: memref<2x134x128xf32, #tpu.memory_space<vmem>>, %arg9: memref<2x3x!tpu.dma_semaphore, #tpu.memory_space<semaphore_mem>>) attributes {dimension_semantics = [#tpu.dimension_semantics<parallel>, #tpu.dimension_semantics<arbitrary>], iteration_bounds = array<i64: 2, 4>, scalar_prefetch = 0 : i64, scratch_operands = 2 : i64, tpu.core_type = #tpu.core_type<tc>, window_params = [{}, {pipeline_mode = #tpu.pipeline_mode<synchronous>, transform_indices = @transform_1, window_bounds = array<i64: 384, 128>}, {pipeline_mode = #tpu.pipeline_mode<synchronous>, transform_indices = @transform_2, window_bounds = array<i64: 1, 128>}, {pipeline_mode = #tpu.pipeline_mode<synchronous>, transform_indices = @transform_3, window_bounds = array<i64: 128, 128>}, {pipeline_mode = #tpu.pipeline_mode<synchronous>, transform_indices = @transform_4, window_bounds = array<i64: 1, 128>}, {transform_indices = @transform_5, window_bounds = array<i64: 1, 128, 128>}]} {
    %c1_i32 = arith.constant 1 : i32
    %0 = arith.andi %arg1, %c1_i32 : i32
    %c1_i32_0 = arith.constant 1 : i32
    %1 = arith.subi %c1_i32_0, %0 : i32
    %c0_i32 = arith.constant 0 : i32
    %2 = arith.cmpi eq, %arg1, %c0_i32 : i32
    %3 = arith.extui %2 : i1 to i32
    %c0_i32_1 = arith.constant 0 : i32
    %4 = arith.cmpi ne, %3, %c0_i32_1 : i32
    scf.if %4 {
      %c128_i32_35 = arith.constant 128 : i32
      %63 = arith.muli %arg1, %c128_i32_35 : i32
      %c3_i32_36 = arith.constant 3 : i32
      %64 = arith.subi %63, %c3_i32_36 : i32
      %c128_i32_37 = arith.constant 128 : i32
      %65 = arith.addi %63, %c128_i32_37 : i32
      %c0_i32_38 = arith.constant 0 : i32
      %c0_i32_39 = arith.constant 0 : i32
      %c0_i32_40 = arith.constant 0 : i32
      %c0_i32_41 = arith.constant 0 : i32
      %66 = tpu.memref_slice %arg2[%arg0, %63, %c0_i32_41] : memref<2x512x128xf32, #tpu.memory_space<any>> -> memref<1x128x128xf32, #tpu.memory_space<any>>
      %67 = tpu.memref_squeeze %66 : memref<1x128x128xf32, #tpu.memory_space<any>> -> memref<128x128xf32, #tpu.memory_space<any>>
      %c3_i32_42 = arith.constant 3 : i32
      %c0_i32_43 = arith.constant 0 : i32
      %68 = tpu.memref_slice %arg8[%c0_i32_38, %c3_i32_42, %c0_i32_43] : memref<2x134x128xf32, #tpu.memory_space<vmem>> -> memref<1x128x128xf32, #tpu.memory_space<vmem>>
      %69 = tpu.memref_squeeze %68 : memref<1x128x128xf32, #tpu.memory_space<vmem>> -> memref<128x128xf32, #tpu.memory_space<vmem>>
      %70 = tpu.memref_slice %arg9[%c0_i32_39, %c0_i32_40] : memref<2x3x!tpu.dma_semaphore, #tpu.memory_space<semaphore_mem>> -> memref<1x1x!tpu.dma_semaphore, #tpu.memory_space<semaphore_mem>>
      %71 = tpu.memref_squeeze %70 : memref<1x1x!tpu.dma_semaphore, #tpu.memory_space<semaphore_mem>> -> memref<!tpu.dma_semaphore, #tpu.memory_space<semaphore_mem>>
      tpu.enqueue_dma source(%67 : memref<128x128xf32, #tpu.memory_space<any>>) target(%69 : memref<128x128xf32, #tpu.memory_space<vmem>>) target_semaphore(%71 : memref<!tpu.dma_semaphore, #tpu.memory_space<semaphore_mem>>)
      %c0_i32_44 = arith.constant 0 : i32
      %72 = arith.cmpi sgt, %arg1, %c0_i32_44 : i32
      %73 = arith.extui %72 : i1 to i32
      %c0_i32_45 = arith.constant 0 : i32
      %c0_i32_46 = arith.constant 0 : i32
      %c1_i32_47 = arith.constant 1 : i32
      %c0_i32_48 = arith.constant 0 : i32
      %74 = arith.cmpi ne, %73, %c0_i32_48 : i32
      scf.if %74 {
        %c0_i32_54 = arith.constant 0 : i32
        %78 = tpu.memref_slice %arg2[%arg0, %64, %c0_i32_54] : memref<2x512x128xf32, #tpu.memory_space<any>> -> memref<1x3x128xf32, #tpu.memory_space<any>>
        %79 = tpu.memref_squeeze %78 : memref<1x3x128xf32, #tpu.memory_space<any>> -> memref<3x128xf32, #tpu.memory_space<any>>
        %c0_i32_55 = arith.constant 0 : i32
        %c0_i32_56 = arith.constant 0 : i32
        %80 = tpu.memref_slice %arg8[%c0_i32_45, %c0_i32_55, %c0_i32_56] : memref<2x134x128xf32, #tpu.memory_space<vmem>> -> memref<1x3x128xf32, #tpu.memory_space<vmem>>
        %81 = tpu.memref_squeeze %80 : memref<1x3x128xf32, #tpu.memory_space<vmem>> -> memref<3x128xf32, #tpu.memory_space<vmem>>
        %82 = tpu.memref_slice %arg9[%c0_i32_46, %c1_i32_47] : memref<2x3x!tpu.dma_semaphore, #tpu.memory_space<semaphore_mem>> -> memref<1x1x!tpu.dma_semaphore, #tpu.memory_space<semaphore_mem>>
        %83 = tpu.memref_squeeze %82 : memref<1x1x!tpu.dma_semaphore, #tpu.memory_space<semaphore_mem>> -> memref<!tpu.dma_semaphore, #tpu.memory_space<semaphore_mem>>
        tpu.enqueue_dma source(%79 : memref<3x128xf32, #tpu.memory_space<any>>) target(%81 : memref<3x128xf32, #tpu.memory_space<vmem>>) target_semaphore(%83 : memref<!tpu.dma_semaphore, #tpu.memory_space<semaphore_mem>>)
      } else {
      }
      %c3_i32_49 = arith.constant 3 : i32
      %75 = arith.cmpi slt, %arg1, %c3_i32_49 : i32
      %76 = arith.extui %75 : i1 to i32
      %c0_i32_50 = arith.constant 0 : i32
      %c0_i32_51 = arith.constant 0 : i32
      %c2_i32_52 = arith.constant 2 : i32
      %c0_i32_53 = arith.constant 0 : i32
      %77 = arith.cmpi ne, %76, %c0_i32_53 : i32
      scf.if %77 {
        %c0_i32_54 = arith.constant 0 : i32
        %78 = tpu.memref_slice %arg2[%arg0, %65, %c0_i32_54] : memref<2x512x128xf32, #tpu.memory_space<any>> -> memref<1x3x128xf32, #tpu.memory_space<any>>
        %79 = tpu.memref_squeeze %78 : memref<1x3x128xf32, #tpu.memory_space<any>> -> memref<3x128xf32, #tpu.memory_space<any>>
        %c131_i32 = arith.constant 131 : i32
        %c0_i32_55 = arith.constant 0 : i32
        %80 = tpu.memref_slice %arg8[%c0_i32_50, %c131_i32, %c0_i32_55] : memref<2x134x128xf32, #tpu.memory_space<vmem>> -> memref<1x3x128xf32, #tpu.memory_space<vmem>>
        %81 = tpu.memref_squeeze %80 : memref<1x3x128xf32, #tpu.memory_space<vmem>> -> memref<3x128xf32, #tpu.memory_space<vmem>>
        %82 = tpu.memref_slice %arg9[%c0_i32_51, %c2_i32_52] : memref<2x3x!tpu.dma_semaphore, #tpu.memory_space<semaphore_mem>> -> memref<1x1x!tpu.dma_semaphore, #tpu.memory_space<semaphore_mem>>
        %83 = tpu.memref_squeeze %82 : memref<1x1x!tpu.dma_semaphore, #tpu.memory_space<semaphore_mem>> -> memref<!tpu.dma_semaphore, #tpu.memory_space<semaphore_mem>>
        tpu.enqueue_dma source(%79 : memref<3x128xf32, #tpu.memory_space<any>>) target(%81 : memref<3x128xf32, #tpu.memory_space<vmem>>) target_semaphore(%83 : memref<!tpu.dma_semaphore, #tpu.memory_space<semaphore_mem>>)
      } else {
      }
    } else {
    }
    %c1_i32_2 = arith.constant 1 : i32
    %5 = arith.addi %arg1, %c1_i32_2 : i32
    %c4_i32 = arith.constant 4 : i32
    %6 = arith.cmpi slt, %5, %c4_i32 : i32
    %7 = arith.extui %6 : i1 to i32
    %c0_i32_3 = arith.constant 0 : i32
    %8 = arith.cmpi ne, %7, %c0_i32_3 : i32
    scf.if %8 {
      %c1_i32_35 = arith.constant 1 : i32
      %63 = arith.addi %arg1, %c1_i32_35 : i32
      %c128_i32_36 = arith.constant 128 : i32
      %64 = arith.muli %63, %c128_i32_36 : i32
      %c3_i32_37 = arith.constant 3 : i32
      %65 = arith.subi %64, %c3_i32_37 : i32
      %c128_i32_38 = arith.constant 128 : i32
      %66 = arith.addi %64, %c128_i32_38 : i32
      %c0_i32_39 = arith.constant 0 : i32
      %c0_i32_40 = arith.constant 0 : i32
      %67 = tpu.memref_slice %arg2[%arg0, %64, %c0_i32_40] : memref<2x512x128xf32, #tpu.memory_space<any>> -> memref<1x128x128xf32, #tpu.memory_space<any>>
      %68 = tpu.memref_squeeze %67 : memref<1x128x128xf32, #tpu.memory_space<any>> -> memref<128x128xf32, #tpu.memory_space<any>>
      %c3_i32_41 = arith.constant 3 : i32
      %c0_i32_42 = arith.constant 0 : i32
      %69 = tpu.memref_slice %arg8[%1, %c3_i32_41, %c0_i32_42] : memref<2x134x128xf32, #tpu.memory_space<vmem>> -> memref<1x128x128xf32, #tpu.memory_space<vmem>>
      %70 = tpu.memref_squeeze %69 : memref<1x128x128xf32, #tpu.memory_space<vmem>> -> memref<128x128xf32, #tpu.memory_space<vmem>>
      %71 = tpu.memref_slice %arg9[%1, %c0_i32_39] : memref<2x3x!tpu.dma_semaphore, #tpu.memory_space<semaphore_mem>> -> memref<1x1x!tpu.dma_semaphore, #tpu.memory_space<semaphore_mem>>
      %72 = tpu.memref_squeeze %71 : memref<1x1x!tpu.dma_semaphore, #tpu.memory_space<semaphore_mem>> -> memref<!tpu.dma_semaphore, #tpu.memory_space<semaphore_mem>>
      tpu.enqueue_dma source(%68 : memref<128x128xf32, #tpu.memory_space<any>>) target(%70 : memref<128x128xf32, #tpu.memory_space<vmem>>) target_semaphore(%72 : memref<!tpu.dma_semaphore, #tpu.memory_space<semaphore_mem>>)
      %c0_i32_43 = arith.constant 0 : i32
      %73 = arith.cmpi sgt, %63, %c0_i32_43 : i32
      %74 = arith.extui %73 : i1 to i32
      %c1_i32_44 = arith.constant 1 : i32
      %c0_i32_45 = arith.constant 0 : i32
      %75 = arith.cmpi ne, %74, %c0_i32_45 : i32
      scf.if %75 {
        %c0_i32_49 = arith.constant 0 : i32
        %79 = tpu.memref_slice %arg2[%arg0, %65, %c0_i32_49] : memref<2x512x128xf32, #tpu.memory_space<any>> -> memref<1x3x128xf32, #tpu.memory_space<any>>
        %80 = tpu.memref_squeeze %79 : memref<1x3x128xf32, #tpu.memory_space<any>> -> memref<3x128xf32, #tpu.memory_space<any>>
        %c0_i32_50 = arith.constant 0 : i32
        %c0_i32_51 = arith.constant 0 : i32
        %81 = tpu.memref_slice %arg8[%1, %c0_i32_50, %c0_i32_51] : memref<2x134x128xf32, #tpu.memory_space<vmem>> -> memref<1x3x128xf32, #tpu.memory_space<vmem>>
        %82 = tpu.memref_squeeze %81 : memref<1x3x128xf32, #tpu.memory_space<vmem>> -> memref<3x128xf32, #tpu.memory_space<vmem>>
        %83 = tpu.memref_slice %arg9[%1, %c1_i32_44] : memref<2x3x!tpu.dma_semaphore, #tpu.memory_space<semaphore_mem>> -> memref<1x1x!tpu.dma_semaphore, #tpu.memory_space<semaphore_mem>>
        %84 = tpu.memref_squeeze %83 : memref<1x1x!tpu.dma_semaphore, #tpu.memory_space<semaphore_mem>> -> memref<!tpu.dma_semaphore, #tpu.memory_space<semaphore_mem>>
        tpu.enqueue_dma source(%80 : memref<3x128xf32, #tpu.memory_space<any>>) target(%82 : memref<3x128xf32, #tpu.memory_space<vmem>>) target_semaphore(%84 : memref<!tpu.dma_semaphore, #tpu.memory_space<semaphore_mem>>)
      } else {
      }
      %c3_i32_46 = arith.constant 3 : i32
      %76 = arith.cmpi slt, %63, %c3_i32_46 : i32
      %77 = arith.extui %76 : i1 to i32
      %c2_i32_47 = arith.constant 2 : i32
      %c0_i32_48 = arith.constant 0 : i32
      %78 = arith.cmpi ne, %77, %c0_i32_48 : i32
      scf.if %78 {
        %c0_i32_49 = arith.constant 0 : i32
        %79 = tpu.memref_slice %arg2[%arg0, %66, %c0_i32_49] : memref<2x512x128xf32, #tpu.memory_space<any>> -> memref<1x3x128xf32, #tpu.memory_space<any>>
        %80 = tpu.memref_squeeze %79 : memref<1x3x128xf32, #tpu.memory_space<any>> -> memref<3x128xf32, #tpu.memory_space<any>>
        %c131_i32 = arith.constant 131 : i32
        %c0_i32_50 = arith.constant 0 : i32
        %81 = tpu.memref_slice %arg8[%1, %c131_i32, %c0_i32_50] : memref<2x134x128xf32, #tpu.memory_space<vmem>> -> memref<1x3x128xf32, #tpu.memory_space<vmem>>
        %82 = tpu.memref_squeeze %81 : memref<1x3x128xf32, #tpu.memory_space<vmem>> -> memref<3x128xf32, #tpu.memory_space<vmem>>
        %83 = tpu.memref_slice %arg9[%1, %c2_i32_47] : memref<2x3x!tpu.dma_semaphore, #tpu.memory_space<semaphore_mem>> -> memref<1x1x!tpu.dma_semaphore, #tpu.memory_space<semaphore_mem>>
        %84 = tpu.memref_squeeze %83 : memref<1x1x!tpu.dma_semaphore, #tpu.memory_space<semaphore_mem>> -> memref<!tpu.dma_semaphore, #tpu.memory_space<semaphore_mem>>
        tpu.enqueue_dma source(%80 : memref<3x128xf32, #tpu.memory_space<any>>) target(%82 : memref<3x128xf32, #tpu.memory_space<vmem>>) target_semaphore(%84 : memref<!tpu.dma_semaphore, #tpu.memory_space<semaphore_mem>>)
      } else {
      }
    } else {
    }
    %c128_i32 = arith.constant 128 : i32
    %9 = arith.muli %arg1, %c128_i32 : i32
    %c3_i32 = arith.constant 3 : i32
    %10 = arith.subi %9, %c3_i32 : i32
    %c128_i32_4 = arith.constant 128 : i32
    %11 = arith.addi %9, %c128_i32_4 : i32
    %c0_i32_5 = arith.constant 0 : i32
    %c0_i32_6 = arith.constant 0 : i32
    %12 = tpu.memref_slice %arg2[%arg0, %9, %c0_i32_6] : memref<2x512x128xf32, #tpu.memory_space<any>> -> memref<1x128x128xf32, #tpu.memory_space<any>>
    %13 = tpu.memref_squeeze %12 : memref<1x128x128xf32, #tpu.memory_space<any>> -> memref<128x128xf32, #tpu.memory_space<any>>
    %c3_i32_7 = arith.constant 3 : i32
    %c0_i32_8 = arith.constant 0 : i32
    %14 = tpu.memref_slice %arg8[%0, %c3_i32_7, %c0_i32_8] : memref<2x134x128xf32, #tpu.memory_space<vmem>> -> memref<1x128x128xf32, #tpu.memory_space<vmem>>
    %15 = tpu.memref_squeeze %14 : memref<1x128x128xf32, #tpu.memory_space<vmem>> -> memref<128x128xf32, #tpu.memory_space<vmem>>
    %16 = tpu.memref_slice %arg9[%0, %c0_i32_5] : memref<2x3x!tpu.dma_semaphore, #tpu.memory_space<semaphore_mem>> -> memref<1x1x!tpu.dma_semaphore, #tpu.memory_space<semaphore_mem>>
    %17 = tpu.memref_squeeze %16 : memref<1x1x!tpu.dma_semaphore, #tpu.memory_space<semaphore_mem>> -> memref<!tpu.dma_semaphore, #tpu.memory_space<semaphore_mem>>
    tpu.wait_dma2 semaphore(%17 : memref<!tpu.dma_semaphore, #tpu.memory_space<semaphore_mem>>) src(%13 : memref<128x128xf32, #tpu.memory_space<any>>) dst(%15 : memref<128x128xf32, #tpu.memory_space<vmem>>)
    %c0_i32_9 = arith.constant 0 : i32
    %18 = arith.cmpi sgt, %arg1, %c0_i32_9 : i32
    %19 = arith.extui %18 : i1 to i32
    %c1_i32_10 = arith.constant 1 : i32
    %c0_i32_11 = arith.constant 0 : i32
    %20 = arith.cmpi ne, %19, %c0_i32_11 : i32
    scf.if %20 {
      %c0_i32_35 = arith.constant 0 : i32
      %63 = tpu.memref_slice %arg2[%arg0, %10, %c0_i32_35] : memref<2x512x128xf32, #tpu.memory_space<any>> -> memref<1x3x128xf32, #tpu.memory_space<any>>
      %64 = tpu.memref_squeeze %63 : memref<1x3x128xf32, #tpu.memory_space<any>> -> memref<3x128xf32, #tpu.memory_space<any>>
      %c0_i32_36 = arith.constant 0 : i32
      %c0_i32_37 = arith.constant 0 : i32
      %65 = tpu.memref_slice %arg8[%0, %c0_i32_36, %c0_i32_37] : memref<2x134x128xf32, #tpu.memory_space<vmem>> -> memref<1x3x128xf32, #tpu.memory_space<vmem>>
      %66 = tpu.memref_squeeze %65 : memref<1x3x128xf32, #tpu.memory_space<vmem>> -> memref<3x128xf32, #tpu.memory_space<vmem>>
      %67 = tpu.memref_slice %arg9[%0, %c1_i32_10] : memref<2x3x!tpu.dma_semaphore, #tpu.memory_space<semaphore_mem>> -> memref<1x1x!tpu.dma_semaphore, #tpu.memory_space<semaphore_mem>>
      %68 = tpu.memref_squeeze %67 : memref<1x1x!tpu.dma_semaphore, #tpu.memory_space<semaphore_mem>> -> memref<!tpu.dma_semaphore, #tpu.memory_space<semaphore_mem>>
      tpu.wait_dma2 semaphore(%68 : memref<!tpu.dma_semaphore, #tpu.memory_space<semaphore_mem>>) src(%64 : memref<3x128xf32, #tpu.memory_space<any>>) dst(%66 : memref<3x128xf32, #tpu.memory_space<vmem>>)
    } else {
    }
    %c3_i32_12 = arith.constant 3 : i32
    %21 = arith.cmpi slt, %arg1, %c3_i32_12 : i32
    %22 = arith.extui %21 : i1 to i32
    %c2_i32 = arith.constant 2 : i32
    %c0_i32_13 = arith.constant 0 : i32
    %23 = arith.cmpi ne, %22, %c0_i32_13 : i32
    scf.if %23 {
      %c0_i32_35 = arith.constant 0 : i32
      %63 = tpu.memref_slice %arg2[%arg0, %11, %c0_i32_35] : memref<2x512x128xf32, #tpu.memory_space<any>> -> memref<1x3x128xf32, #tpu.memory_space<any>>
      %64 = tpu.memref_squeeze %63 : memref<1x3x128xf32, #tpu.memory_space<any>> -> memref<3x128xf32, #tpu.memory_space<any>>
      %c131_i32 = arith.constant 131 : i32
      %c0_i32_36 = arith.constant 0 : i32
      %65 = tpu.memref_slice %arg8[%0, %c131_i32, %c0_i32_36] : memref<2x134x128xf32, #tpu.memory_space<vmem>> -> memref<1x3x128xf32, #tpu.memory_space<vmem>>
      %66 = tpu.memref_squeeze %65 : memref<1x3x128xf32, #tpu.memory_space<vmem>> -> memref<3x128xf32, #tpu.memory_space<vmem>>
      %67 = tpu.memref_slice %arg9[%0, %c2_i32] : memref<2x3x!tpu.dma_semaphore, #tpu.memory_space<semaphore_mem>> -> memref<1x1x!tpu.dma_semaphore, #tpu.memory_space<semaphore_mem>>
      %68 = tpu.memref_squeeze %67 : memref<1x1x!tpu.dma_semaphore, #tpu.memory_space<semaphore_mem>> -> memref<!tpu.dma_semaphore, #tpu.memory_space<semaphore_mem>>
      tpu.wait_dma2 semaphore(%68 : memref<!tpu.dma_semaphore, #tpu.memory_space<semaphore_mem>>) src(%64 : memref<3x128xf32, #tpu.memory_space<any>>) dst(%66 : memref<3x128xf32, #tpu.memory_space<vmem>>)
    } else {
    }
    %c0_i32_14 = arith.constant 0 : i32
    %24 = arith.cmpi eq, %arg1, %c0_i32_14 : i32
    %25 = arith.extui %24 : i1 to i32
    %c0_i32_15 = arith.constant 0 : i32
    %26 = arith.cmpi ne, %25, %c0_i32_15 : i32
    scf.if %26 {
      %cst_35 = arith.constant 0.000000e+00 : f32
      %63 = vector.broadcast %cst_35 : f32 to vector<3x128xf32>
      %64 = arith.index_cast %0 : i32 to index
      %c0_36 = arith.constant 0 : index
      %c0_37 = arith.constant 0 : index
      %65 = vector.load %arg8[%64, %c0_36, %c0_37] : memref<2x134x128xf32, #tpu.memory_space<vmem>>, vector<1x3x128xf32>
      %66 = vector.shape_cast %65 : vector<1x3x128xf32> to vector<3x128xf32>
      %67 = vector.shape_cast %63 : vector<3x128xf32> to vector<1x3x128xf32>
      tpu.vector_store %arg8[%64, %c0_36, %c0_37], %67 {strides = array<i32>} : memref<2x134x128xf32, #tpu.memory_space<vmem>>, vector<1x3x128xf32>,
    } else {
    }
    %c3_i32_16 = arith.constant 3 : i32
    %27 = arith.cmpi eq, %arg1, %c3_i32_16 : i32
    %28 = arith.extui %27 : i1 to i32
    %c0_i32_17 = arith.constant 0 : i32
    %29 = arith.cmpi ne, %28, %c0_i32_17 : i32
    scf.if %29 {
      %cst_35 = arith.constant 0.000000e+00 : f32
      %63 = vector.broadcast %cst_35 : f32 to vector<3x128xf32>
      %64 = arith.index_cast %0 : i32 to index
      %c131 = arith.constant 131 : index
      %c0_36 = arith.constant 0 : index
      %65 = vector.load %arg8[%64, %c131, %c0_36] : memref<2x134x128xf32, #tpu.memory_space<vmem>>, vector<1x3x128xf32>
      %66 = vector.shape_cast %65 : vector<1x3x128xf32> to vector<3x128xf32>
      %67 = vector.shape_cast %63 : vector<3x128xf32> to vector<1x3x128xf32>
      tpu.vector_store %arg8[%64, %c131, %c0_36], %67 {strides = array<i32>} : memref<2x134x128xf32, #tpu.memory_space<vmem>>, vector<1x3x128xf32>,
    } else {
    }
    %30 = arith.index_cast %0 : i32 to index
    %c0 = arith.constant 0 : index
    %c0_18 = arith.constant 0 : index
    %31 = vector.load %arg8[%30, %c0, %c0_18] : memref<2x134x128xf32, #tpu.memory_space<vmem>>, vector<1x128x128xf32>
    %32 = vector.shape_cast %31 : vector<1x128x128xf32> to vector<128x128xf32>
    %33 = arith.index_cast %0 : i32 to index
    %c3 = arith.constant 3 : index
    %c0_19 = arith.constant 0 : index
    %34 = vector.load %arg8[%33, %c3, %c0_19] : memref<2x134x128xf32, #tpu.memory_space<vmem>>, vector<1x128x128xf32>
    %35 = vector.shape_cast %34 : vector<1x128x128xf32> to vector<128x128xf32>
    %36 = arith.index_cast %0 : i32 to index
    %c6 = arith.constant 6 : index
    %c0_20 = arith.constant 0 : index
    %37 = vector.load %arg8[%36, %c6, %c0_20] : memref<2x134x128xf32, #tpu.memory_space<vmem>>, vector<1x128x128xf32>
    %38 = vector.shape_cast %37 : vector<1x128x128xf32> to vector<128x128xf32>
    %39 = arith.truncf %32 : vector<128x128xf32> to vector<128x128xbf16>
    %40 = arith.truncf %35 : vector<128x128xf32> to vector<128x128xbf16>
    %41 = arith.truncf %38 : vector<128x128xf32> to vector<128x128xbf16>
    %42 = tpu.concatenate %39, %40, %41 in 1 : vector<128x128xbf16>, vector<128x128xbf16>, vector<128x128xbf16> -> vector<128x384xbf16>
    %c0_21 = arith.constant 0 : index
    %c0_22 = arith.constant 0 : index
    %43 = vector.load %arg3[%c0_21, %c0_22] : memref<384x128xbf16, #tpu.memory_space<vmem>>, vector<384x128xbf16>
    %cst = arith.constant dense<0.000000e+00> : vector<128x128xf32>
    %44 = tpu.matmul %42, %43, %cst {dimension_numbers = #tpu.dot_dimension_numbers<[1], [0], [0], [1], [0, 0, 1, 1], [], []>} : vector<128x384xbf16>, vector<384x128xbf16>, vector<128x128xf32> -> vector<128x128xf32>
    %c0_23 = arith.constant 0 : index
    %c0_24 = arith.constant 0 : index
    %45 = vector.load %arg4[%c0_23, %c0_24] : memref<1x128xf32, #tpu.memory_space<vmem>>, vector<1x128xf32>
    %46 = vector.broadcast %45 : vector<1x128xf32> to vector<128x128xf32>
    %47 = arith.addf %44, %46 : vector<128x128xf32>
    %48 = arith.truncf %47 : vector<128x128xf32> to vector<128x128xbf16>
    %c0_25 = arith.constant 0 : index
    %c0_26 = arith.constant 0 : index
    %49 = vector.load %arg5[%c0_25, %c0_26] : memref<128x128xbf16, #tpu.memory_space<vmem>>, vector<128x128xbf16>
    %cst_27 = arith.constant dense<0.000000e+00> : vector<128x128xf32>
    %50 = tpu.matmul %48, %49, %cst_27 {dimension_numbers = #tpu.dot_dimension_numbers<[1], [0], [0], [1], [0, 0, 1, 1], [], []>} : vector<128x128xbf16>, vector<128x128xbf16>, vector<128x128xf32> -> vector<128x128xf32>
    %c0_28 = arith.constant 0 : index
    %c0_29 = arith.constant 0 : index
    %51 = vector.load %arg6[%c0_28, %c0_29] : memref<1x128xf32, #tpu.memory_space<vmem>>, vector<1x128xf32>
    %52 = vector.broadcast %51 : vector<1x128xf32> to vector<128x128xf32>
    %53 = arith.addf %50, %52 : vector<128x128xf32>
    %54 = arith.addf %53, %35 : vector<128x128xf32>
    %cst_30 = arith.constant 0.000000e+00 : f32
    %55 = vector.broadcast %cst_30 : f32 to vector<128x128xf32>
    %56 = arith.cmpf oge, %54, %55 : vector<128x128xf32>
    %cst_31 = arith.constant 2.000000e-01 : f32
    %57 = vector.broadcast %cst_31 : f32 to vector<128x128xf32>
    %58 = arith.mulf %57, %54 : vector<128x128xf32>
    %59 = arith.select %56, %54, %58 : vector<128x128xi1>, vector<128x128xf32>
    %c0_32 = arith.constant 0 : index
    %c0_33 = arith.constant 0 : index
    %c0_34 = arith.constant 0 : index
    %60 = vector.load %arg7[%c0_32, %c0_33, %c0_34] : memref<1x128x128xf32, #tpu.memory_space<vmem>>, vector<1x128x128xf32>
    %61 = vector.shape_cast %60 : vector<1x128x128xf32> to vector<128x128xf32>
    %62 = vector.shape_cast %59 : vector<128x128xf32> to vector<1x128x128xf32>
    tpu.vector_store %arg7[%c0_32, %c0_33, %c0_34], %62 {strides = array<i32>} : memref<1x128x128xf32, #tpu.memory_space<vmem>>, vector<1x128x128xf32>,
    return
  }
  func.func @transform_1(%arg0: i32, %arg1: i32) -> (i32, i32) {
    %c0_i32 = arith.constant 0 : i32
    %c0_i32_0 = arith.constant 0 : i32
    %c0_i32_1 = arith.constant 0 : i32
    return %c0_i32, %c0_i32_0 : i32, i32
  }
  func.func @transform_2(%arg0: i32, %arg1: i32) -> (i32, i32) {
    %c0_i32 = arith.constant 0 : i32
    %c0_i32_0 = arith.constant 0 : i32
    %c0_i32_1 = arith.constant 0 : i32
    return %c0_i32, %c0_i32_0 : i32, i32
  }
  func.func @transform_3(%arg0: i32, %arg1: i32) -> (i32, i32) {
    %c0_i32 = arith.constant 0 : i32
    %c0_i32_0 = arith.constant 0 : i32
    %c0_i32_1 = arith.constant 0 : i32
    return %c0_i32, %c0_i32_0 : i32, i32
  }
  func.func @transform_4(%arg0: i32, %arg1: i32) -> (i32, i32) {
    %c0_i32 = arith.constant 0 : i32
    %c0_i32_0 = arith.constant 0 : i32
    %c0_i32_1 = arith.constant 0 : i32
    return %c0_i32, %c0_i32_0 : i32, i32
  }
  func.func @transform_5(%arg0: i32, %arg1: i32) -> (i32, i32, i32) {
    %c0_i32 = arith.constant 0 : i32
    %c0_i32_0 = arith.constant 0 : i32
    return %arg0, %arg1, %c0_i32 : i32, i32, i32
  }
}

</mosaic_0001>

<llo_original>
// kernel: dilated_block.1
$region0: #{dilated_block.1}
  #allocation0 [shape = 'u32[]', space=smem, size = 0x4, offset = 0x4, fixed_abs, tag = 'smem constant byte address 0x4 - core index']
  #allocation1 [shape = 'u32[144,128]{1,0:T(1,128)}', space=vmem, size = 0x12000, scoped, tag = 'internal scratch']
  #allocation2 [shape = 'f32[2,134,128]{2,1,0:T(8,128)}', space=vmem, size = 0x22000, scoped, tag = 'scratch operand']
  #allocation3 [shape = 's32[6]{0}', space=sflag, size = 0x18, scoped, tag = 'scratch operand']
  #allocation4 [shape = 's32[]', space=sflag, size = 0x4, offset = 0, fixed_abs, tag = 'sflag constant byte address 0x0 - dummy sync flag']
  #allocation5 [shape = 's32[]', space=sflag, size = 0x4, offset = 0, fixed_abs, tag = 'sflag constant byte address 0x0 - dummy sync flag']
  #allocation6 [shape = 's32[]', space=sflag, size = 0x4, offset = 0, fixed_abs, tag = 'sflag constant byte address 0x0 - dummy sync flag']
  #allocation7 [shape = 's32[]', space=sflag, size = 0x4, offset = 0, fixed_abs, tag = 'sflag constant byte address 0x0 - dummy sync flag']
  #allocation8 [shape = 's32[]', space=sflag, size = 0x4, offset = 0, fixed_abs, tag = 'sflag constant byte address 0x0 - dummy sync flag']
  #allocation9 [shape = 's32[]', space=sflag, size = 0x4, offset = 0, fixed_abs, tag = 'sflag constant byte address 0x0 - dummy sync flag']
  %s0 = inlined_call_operand.vmem [shape: f32[2,512,128], index: 0, kind: input, shape index: {}]
  %s1 = inlined_call_operand.vmem [shape: bf16[384,128], index: 1, kind: input, shape index: {}]
  %s2 = inlined_call_operand.vmem [shape: f32[1,128], index: 2, kind: input, shape index: {}]
  %s3 = inlined_call_operand.vmem [shape: bf16[128,128], index: 3, kind: input, shape index: {}]
  %s4 = inlined_call_operand.vmem [shape: f32[1,128], index: 4, kind: input, shape index: {}]
  %s5 = inlined_call_operand.vmem [shape: f32[2,512,128], index: 5, kind: output, shape index: {}]
  %s6 = sld [smem:[#allocation0]]
  $region277: #{dilated_block.1} parent=0
    _
  %s8 = ssub.s32 1, %s6
  %s9 = scalar_select 0, %s8, %s6
  loop: start=0, step=1, limit=10
  $region2: #{dilated_block.1} parent=0 // loop_pre_header
    _
  $region3: #{dilated_block.1} parent=0 // loop_header
    %s11 = sphi 0, %s15
    %p12 = scmp.ge.s32.totalorder %s11, 10
    %s18 = sphi 0, %s30
    %s19 = sphi 0, %s26
    %s20 = sphi 0, %s18
    %s21 = sphi 0, %s19
    %s22 = sphi 0, %s20
    %s23 = sphi 0, %s21
    %s31 = sphi 0, %s31
    %s33 = sphi 0, %s31
    %s34 = sphi 0, %s33
    %s48 = sphi 0, %s34
    %s52 = sphi 0, %s52
    %s54 = sphi 0, %s52
    %s55 = sphi 0, %s54
    %s69 = sphi 0, %s55
    %s73 = sphi 0, %s73
    %s75 = sphi 0, %s73
    %s76 = sphi 0, %s75
    %s90 = sphi 0, %s76
    %s94 = sphi 0, %s94
    %s96 = sphi 0, %s94
    %s97 = sphi 0, %s96
    %s111 = sphi 0, %s97
    %s119 = sphi 0, %s121
    %s122 = sphi 0, %s119
    %s123 = sphi 0, %s122
    %s139 = sphi 0, %s123
  $region4: #{dilated_block.1} parent=0 // loop_header_branch
    %14 = sbr.rel (%p12) target = $region8
  $region5: #{dilated_block.1} parent=0 // loop_body
    %s16 = ssub.s32 %s11, 1
    %s17 = ssub.s32 %s11, 2
    %s24 = sadd.s32 1, %s19
    %p25 = scmp.ge.s32.totalorder %s24, 4
    %s26 = scalar_select %p25, 0, %s24
    %s27 = sadd.s32 1, %s18
    %s28 = scalar_select %p25, %s27, %s18
    %p29 = scmp.ge.s32.totalorder %s28, 2
    %s30 = scalar_select %p29, 0, %s28
    %s32 = sadd.s32 %s31, 1
    %p35 = scmp.eq.s32.totalorder %s11, 7
    %p36 = scmp.ne.s32.totalorder %s31, %s33
    %p37 = scmp.eq.s32.totalorder %s11, 0
    %p38 = por %p36, %p37
    %p39 = scmp.ne.s32.totalorder %s31, %s33
    %p40 = scmp.eq.s32.totalorder %s16, 7
    %p41 = por %p39, %p40
    %p42 = scmp.ne.s32.totalorder %s33, %s34
    %p43 = scmp.eq.s32.totalorder %s16, 0
    %p44 = por %p42, %p43
    %p45 = scmp.ne.s32.totalorder %s33, %s34
    %p46 = scmp.eq.s32.totalorder %s17, 7
    %p47 = por %p45, %p46
    %p49 = scmp.ne.s32.totalorder %s34, %s48
    %p50 = scmp.eq.s32.totalorder %s17, 0
    %p51 = por %p49, %p50
    %s53 = sadd.s32 %s52, 1
    %p56 = scmp.eq.s32.totalorder %s11, 7
    %p57 = scmp.ne.s32.totalorder %s52, %s54
    %p58 = scmp.eq.s32.totalorder %s11, 0
    %p59 = por %p57, %p58
    %p60 = scmp.ne.s32.totalorder %s52, %s54
    %p61 = scmp.eq.s32.totalorder %s16, 7
    %p62 = por %p60, %p61
    %p63 = scmp.ne.s32.totalorder %s54, %s55
    %p64 = scmp.eq.s32.totalorder %s16, 0
    %p65 = por %p63, %p64
    %p66 = scmp.ne.s32.totalorder %s54, %s55
    %p67 = scmp.eq.s32.totalorder %s17, 7
    %p68 = por %p66, %p67
    %p70 = scmp.ne.s32.totalorder %s55, %s69
    %p71 = scmp.eq.s32.totalorder %s17, 0
    %p72 = por %p70, %p71
    %s74 = sadd.s32 %s73, 1
    %p77 = scmp.eq.s32.totalorder %s11, 7
    %p78 = scmp.ne.s32.totalorder %s73, %s75
    %p79 = scmp.eq.s32.totalorder %s11, 0
    %p80 = por %p78, %p79
    %p81 = scmp.ne.s32.totalorder %s73, %s75
    %p82 = scmp.eq.s32.totalorder %s16, 7
    %p83 = por %p81, %p82
    %p84 = scmp.ne.s32.totalorder %s75, %s76
    %p85 = scmp.eq.s32.totalorder %s16, 0
    %p86 = por %p84, %p85
    %p87 = scmp.ne.s32.totalorder %s75, %s76
    %p88 = scmp.eq.s32.totalorder %s17, 7
    %p89 = por %p87, %p88
    %p91 = scmp.ne.s32.totalorder %s76, %s90
    %p92 = scmp.eq.s32.totalorder %s17, 0
    %p93 = por %p91, %p92
    %s95 = sadd.s32 %s94, 1
    %p98 = scmp.eq.s32.totalorder %s11, 7
    %p99 = scmp.ne.s32.totalorder %s94, %s96
    %p100 = scmp.eq.s32.totalorder %s11, 0
    %p101 = por %p99, %p100
    %p102 = scmp.ne.s32.totalorder %s94, %s96
    %p103 = scmp.eq.s32.totalorder %s16, 7
    %p104 = por %p102, %p103
    %p105 = scmp.ne.s32.totalorder %s96, %s97
    %p106 = scmp.eq.s32.totalorder %s16, 0
    %p107 = por %p105, %p106
    %p108 = scmp.ne.s32.totalorder %s96, %s97
    %p109 = scmp.eq.s32.totalorder %s17, 7
    %p110 = por %p108, %p109
    %p112 = scmp.ne.s32.totalorder %s97, %s111
    %p113 = scmp.eq.s32.totalorder %s17, 0
    %p114 = por %p112, %p113
    %s115 = ssub.s32 %s18, %s30
    %s116 = ssub.s32 %s19, %s26
    %s117 = sor.u32 %s115, %s116
    %p118 = scmp.eq.s32.totalorder %s117, 0
    %s120 = sadd.s32 %s119, 1
    %s121 = scalar_select %p118, %s119, %s120
    %p124 = pneg %p118
    %p125 = scmp.eq.s32.totalorder %s11, 7
    %p126 = por %p124, %p125
    %p127 = scmp.ne.s32.totalorder %s119, %s122
    %p128 = scmp.eq.s32.totalorder %s11, 0
    %p129 = por %p127, %p128
    %p130 = scmp.ne.s32.totalorder %s119, %s122
    %p131 = scmp.eq.s32.totalorder %s16, 7
    %p132 = por %p130, %p131
    %p133 = scmp.ne.s32.totalorder %s122, %s123
    %p134 = scmp.eq.s32.totalorder %s16, 0
    %p135 = por %p133, %p134
    %p136 = scmp.ne.s32.totalorder %s122, %s123
    %p137 = scmp.eq.s32.totalorder %s17, 7
    %p138 = por %p136, %p137
    %p140 = scmp.ne.s32.totalorder %s123, %s139
    %p141 = scmp.eq.s32.totalorder %s17, 0
    %p142 = por %p140, %p141
    %p143 = scmp.le.s32.totalorder 1, %s11
    %p144 = scmp.lt.s32.totalorder %s11, 9
    %p145 = pnand %p143, %p144
    %p146 = pneg %p145
    // Predicated region
    $region9: #{dilated_block.1} parent=5 // pred_check
      _
    $region10: #{dilated_block.1} parent=5 // pred_check_branch
      %148 = sbr.rel (%p145) target = $region12
    $region11: #{dilated_block.1} parent=5 // pred_region
      %s149 = ssub.s32 %s11, 1
      // Predicated region
      $region13: #{dilated_block.1} parent=11 // pred_check
        %p150 = pneg %p44
      $region14: #{dilated_block.1} parent=11 // pred_check_branch
        %152 = sbr.rel (%p150) target = $region16
      $region15: #{dilated_block.1} parent=11 // pred_region
        _
      $region16: #{dilated_block.1} parent=11 // pred_fallthru
        _
      // Predicated region
      $region17: #{dilated_block.1} parent=11 // pred_check
        %p153 = pneg %p65
      $region18: #{dilated_block.1} parent=11 // pred_check_branch
        %155 = sbr.rel (%p153) target = $region20
      $region19: #{dilated_block.1} parent=11 // pred_region
        _
      $region20: #{dilated_block.1} parent=11 // pred_fallthru
        _
      // Predicated region
      $region21: #{dilated_block.1} parent=11 // pred_check
        %p156 = pneg %p86
      $region22: #{dilated_block.1} parent=11 // pred_check_branch
        %158 = sbr.rel (%p156) target = $region24
      $region23: #{dilated_block.1} parent=11 // pred_region
        _
      $region24: #{dilated_block.1} parent=11 // pred_fallthru
        _
      // Predicated region
      $region25: #{dilated_block.1} parent=11 // pred_check
        %p159 = pneg %p107
      $region26: #{dilated_block.1} parent=11 // pred_check_branch
        %161 = sbr.rel (%p159) target = $region28
      $region27: #{dilated_block.1} parent=11 // pred_region
        _
      $region28: #{dilated_block.1} parent=11 // pred_fallthru
        _
    $region12: #{dilated_block.1} parent=5 // pred_fallthru
      _
    %p162 = scmp.lt.s32.totalorder %s11, 8
    // Predicated region
    $region29: #{dilated_block.1} parent=5 // pred_check
      %p163 = pneg %p162
    $region30: #{dilated_block.1} parent=5 // pred_check_branch
      %165 = sbr.rel (%p163) target = $region32
    $region31: #{dilated_block.1} parent=5 // pred_region
      _
    $region32: #{dilated_block.1} parent=5 // pred_fallthru
      _
    %p166 = scmp.le.s32.totalorder 1, %s11
    %p167 = scmp.lt.s32.totalorder %s11, 9
    %p168 = pnand %p166, %p167
    %p169 = pneg %p168
    // Predicated region
    $region33: #{dilated_block.1} parent=5 // pred_check
      _
    $region34: #{dilated_block.1} parent=5 // pred_check_branch
      %171 = sbr.rel (%p168) target = $region36
    $region35: #{dilated_block.1} parent=5 // pred_region
      %s172 = ssub.s32 %s11, 1
      %p173 = pneg %p44
      %p174 = pneg %p41
      %p175 = pneg %p65
      %p176 = pneg %p62
      %p177 = pneg %p86
      %p178 = pneg %p83
      %p179 = pneg %p107
      %p180 = pneg %p104
      %p181 = pneg %p135
      %p182 = pneg %p132
      %s183 = smul.u32 16, %s21
      %p184 = scmp.lt.s32.totalorder %s20, 1
      %s185 = scalar_select %p184, %s20, 1
      %p186 = scmp.lt.s32.totalorder %s183, 63
      %s187 = scalar_select %p186, %s183, 63
      %s188 = smul.addr %s185, 64
      %s189 = sadd.s32 %s187, %s188
      %s190 = smul.addr %s189, 8
      %s191 = scalar_lea.vmem %s5, %s190
      %s192 = smul.u32 16, %s21
      %p193 = scmp.lt.s32.totalorder %s20, 1
      %s194 = scalar_select %p193, %s20, 1
      %p195 = scmp.lt.s32.totalorder %s192, 63
      %s196 = scalar_select %p195, %s192, 63
      %s197 = smul.addr %s194, 64
      %s198 = sadd.s32 %s196, %s197
      %s199 = smul.addr %s198, 8
      %s200 = scalar_lea.vmem %s5, %s199
      %s201 = smul.u32 16, %s21
      %s203 = sand.u32 %s21, 1
      %s204 = ssub.s32 1, %s203
      %p205 = scmp.eq.s32.totalorder %s21, 0
      // Predicated region
      $region37: #{dilated_block.1} parent=35 // pred_check
        %p206 = pneg %p205
      $region38: #{dilated_block.1} parent=35 // pred_check_branch
        %208 = sbr.rel (%p206) target = $region40
      $region39: #{dilated_block.1} parent=35 // pred_region
        %s209 = smul.u32 %s21, 128
        %s210 = ssub.s32 %s209, 3
        %s211 = sadd.s32 %s209, 128
        %s212 = smul.u32 %s20, 512
        %s213 = sadd.s32 %s209, %s212
        %s214 = scalar_lea.vmem %s0, %s213
        %s215 = scalar_lea.vmem [#allocation2], 3
        %p217 = scmp.lt.u32.totalorder 128, 8
        %p218 = pneg %p217
        // Predicated region
        $region41: #{dilated_block.1} parent=39 // pred_check
          _
        $region42: #{dilated_block.1} parent=39 // pred_check_branch
          %220 = sbr.rel (%p217) target = $region44
        $region43: #{dilated_block.1} parent=39 // pred_region
          %s236 = sand.u32 128, 7
          %p237 = scmp.eq.s32.totalorder %s236, 0
          // Predicated region
          $region56: #{dilated_block.1} parent=43 // pred_check
            %p238 = pneg %p237
          $region57: #{dilated_block.1} parent=43 // pred_check_branch
            %240 = sbr.rel (%p238) target = $region59
          $region58: #{dilated_block.1} parent=43 // pred_region
            loop: start=0, step=1, limit=1
            $region60: #{dilated_block.1} parent=58 // loop_pre_header
              _
            $region61: #{dilated_block.1} parent=58 // loop_header
              %s242 = sphi 0, %s246
              %p243 = scmp.ge.s32.totalorder %s242, 1
              %s247 = sphi %s214, %s214
              %s248 = sphi %s215, %s215
            $region62: #{dilated_block.1} parent=58 // loop_header_branch
              %245 = sbr.rel (%p243) target = $region66
            $region63: #{dilated_block.1} parent=58 // loop_body
              %v249 = vld [vmem:[%s247] sm:$0xff]
              %250 = vst [vmem:[%s248] sm:$0xff] %v249
              %v251 = vld [vmem:[%s247 + $0x8] sm:$0xff]
              %252 = vst [vmem:[%s248 + $0x8] sm:$0xff] %v251
              %v253 = vld [vmem:[%s247 + $0x10] sm:$0xff]
              %254 = vst [vmem:[%s248 + $0x10] sm:$0xff] %v253
              %v255 = vld [vmem:[%s247 + $0x18] sm:$0xff]
              %256 = vst [vmem:[%s248 + $0x18] sm:$0xff] %v255
              %v257 = vld [vmem:[%s247 + $0x20] sm:$0xff]
              %258 = vst [vmem:[%s248 + $0x20] sm:$0xff] %v257
              %v259 = vld [vmem:[%s247 + $0x28] sm:$0xff]
              %260 = vst [vmem:[%s248 + $0x28] sm:$0xff] %v259
              %v261 = vld [vmem:[%s247 + $0x30] sm:$0xff]
              %262 = vst [vmem:[%s248 + $0x30] sm:$0xff] %v261
              %v263 = vld [vmem:[%s247 + $0x38] sm:$0xff]
              %264 = vst [vmem:[%s248 + $0x38] sm:$0xff] %v263
              %v265 = vld [vmem:[%s247 + $0x40] sm:$0xff]
              %266 = vst [vmem:[%s248 + $0x40] sm:$0xff] %v265
              %v267 = vld [vmem:[%s247 + $0x48] sm:$0xff]
              %268 = vst [vmem:[%s248 + $0x48] sm:$0xff] %v267
              %v269 = vld [vmem:[%s247 + $0x50] sm:$0xff]
              %270 = vst [vmem:[%s248 + $0x50] sm:$0xff] %v269
              %v271 = vld [vmem:[%s247 + $0x58] sm:$0xff]
              %272 = vst [vmem:[%s248 + $0x58] sm:$0xff] %v271
              %v273 = vld [vmem:[%s247 + $0x60] sm:$0xff]
              %274 = vst [vmem:[%s248 + $0x60] sm:$0xff] %v273
              %v275 = vld [vmem:[%s247 + $0x68] sm:$0xff]
              %276 = vst [vmem:[%s248 + $0x68] sm:$0xff] %v275
              %v277 = vld [vmem:[%s247 + $0x70] sm:$0xff]
              %278 = vst [vmem:[%s248 + $0x70] sm:$0xff] %v277
              %v279 = vld [vmem:[%s247 + $0x78] sm:$0xff]
              %280 = vst [vmem:[%s248 + $0x78] sm:$0xff] %v279
            $region64: #{dilated_block.1} parent=58 // loop_footer
              %s246 = sadd.s32 1, %s242
            $region65: #{dilated_block.1} parent=58 // loop_footer_branch
              %241 = sbr.rel target = $region61
            $region66: #{dilated_block.1} parent=58 // loop_exit
              _
          $region59: #{dilated_block.1} parent=43 // pred_fallthru
            _
          %p281 = pneg %p237
          // Predicated region
          $region67: #{dilated_block.1} parent=43 // pred_check
            _
          $region68: #{dilated_block.1} parent=43 // pred_check_branch
            %283 = sbr.rel (%p237) target = $region70
          $region69: #{dilated_block.1} parent=43 // pred_region
            %s284 = sand.u32 128, 7
          $region70: #{dilated_block.1} parent=43 // pred_fallthru
            _
        $region44: #{dilated_block.1} parent=39 // pred_fallthru
          _
        // Predicated region
        $region45: #{dilated_block.1} parent=39 // pred_check
          %p221 = pneg %p217
        $region46: #{dilated_block.1} parent=39 // pred_check_branch
          %223 = sbr.rel (%p221) target = $region48
        $region47: #{dilated_block.1} parent=39 // pred_region
          %s224 = sshll.u32 1, 128
          %s225 = ssub.s32 %s224, 1
          loop: start=0, step=1, limit=1
          $region49: #{dilated_block.1} parent=47 // loop_pre_header
            _
          $region50: #{dilated_block.1} parent=47 // loop_header
            %s227 = sphi 0, %s231
            %p228 = scmp.ge.s32.totalorder %s227, 1
            %s232 = sphi %s214, %s214
            %s233 = sphi %s215, %s215
          $region51: #{dilated_block.1} parent=47 // loop_header_branch
            %230 = sbr.rel (%p228) target = $region55
          $region52: #{dilated_block.1} parent=47 // loop_body
            %v234 = vld [vmem:[%s232] sm:%s225]
            %235 = vst [vmem:[%s233] sm:%s225] %v234
          $region53: #{dilated_block.1} parent=47 // loop_footer
            %s231 = sadd.s32 1, %s227
          $region54: #{dilated_block.1} parent=47 // loop_footer_branch
            %226 = sbr.rel target = $region50
          $region55: #{dilated_block.1} parent=47 // loop_exit
            _
        $region48: #{dilated_block.1} parent=39 // pred_fallthru
          _
        // Predicated region
        $region71: #{dilated_block.1} parent=39 // pred_check
          _
        $region72: #{dilated_block.1} parent=39 // pred_check_branch
          %287 = sbr.rel (0) target = $region74
        $region73: #{dilated_block.1} parent=39 // pred_region
          %288 = vsyncadd [#allocation3], 2048
        $region74: #{dilated_block.1} parent=39 // pred_fallthru
          _
        %p289 = scmp.gt.s32.totalorder %s21, 0
        // Predicated region
        $region75: #{dilated_block.1} parent=39 // pred_check
          %p290 = pneg %p289
        $region76: #{dilated_block.1} parent=39 // pred_check_branch
          %292 = sbr.rel (%p290) target = $region78
        $region77: #{dilated_block.1} parent=39 // pred_region
          %s293 = sadd.s32 %s210, %s212
          %s294 = scalar_lea.vmem %s0, %s293
          %s295 = scalar_lea.sflag [#allocation3], 1
          %p297 = scmp.lt.u32.totalorder 3, 8
          %p298 = pneg %p297
          // Predicated region
          $region79: #{dilated_block.1} parent=77 // pred_check
            _
          $region80: #{dilated_block.1} parent=77 // pred_check_branch
            %300 = sbr.rel (%p297) target = $region82
          $region81: #{dilated_block.1} parent=77 // pred_region
            %s316 = sand.u32 3, 7
            %p317 = scmp.eq.s32.totalorder %s316, 0
            %p318 = pneg %p317
            // Predicated region
            $region94: #{dilated_block.1} parent=81 // pred_check
              _
            $region95: #{dilated_block.1} parent=81 // pred_check_branch
              %320 = sbr.rel (%p317) target = $region97
            $region96: #{dilated_block.1} parent=81 // pred_region
              %s321 = sand.u32 3, 7
              %s322 = ssub.s32 3, %s321
              %s323 = scalar_lea.vmem %s294, %s322
              %s324 = ssub.s32 3, %s321
              %s325 = scalar_lea.vmem [#allocation2], %s324
              %s326 = sshll.u32 1, %s321
              %s327 = ssub.s32 %s326, 1
              loop: start=0, step=1, limit=1
              $region98: #{dilated_block.1} parent=96 // loop_pre_header
                _
              $region99: #{dilated_block.1} parent=96 // loop_header
                %s329 = sphi 0, %s333
                %p330 = scmp.ge.s32.totalorder %s329, 1
                %s334 = sphi %s323, %s323
                %s335 = sphi %s325, %s325
              $region100: #{dilated_block.1} parent=96 // loop_header_branch
                %332 = sbr.rel (%p330) target = $region104
              $region101: #{dilated_block.1} parent=96 // loop_body
                %v336 = vld [vmem:[%s334] sm:%s327]
                %337 = vst [vmem:[%s335] sm:%s327] %v336
              $region102: #{dilated_block.1} parent=96 // loop_footer
                %s333 = sadd.s32 1, %s329
              $region103: #{dilated_block.1} parent=96 // loop_footer_branch
                %328 = sbr.rel target = $region99
              $region104: #{dilated_block.1} parent=96 // loop_exit
                _
            $region97: #{dilated_block.1} parent=81 // pred_fallthru
              _
          $region82: #{dilated_block.1} parent=77 // pred_fallthru
            _
          // Predicated region
          $region83: #{dilated_block.1} parent=77 // pred_check
            %p301 = pneg %p297
          $region84: #{dilated_block.1} parent=77 // pred_check_branch
            %303 = sbr.rel (%p301) target = $region86
          $region85: #{dilated_block.1} parent=77 // pred_region
            %s304 = sshll.u32 1, 3
            %s305 = ssub.s32 %s304, 1
            loop: start=0, step=1, limit=1
            $region87: #{dilated_block.1} parent=85 // loop_pre_header
              _
            $region88: #{dilated_block.1} parent=85 // loop_header
              %s307 = sphi 0, %s311
              %p308 = scmp.ge.s32.totalorder %s307, 1
              %s312 = sphi %s294, %s294
              %s313 = sphi [#allocation2], [#allocation2]
            $region89: #{dilated_block.1} parent=85 // loop_header_branch
              %310 = sbr.rel (%p308) target = $region93
            $region90: #{dilated_block.1} parent=85 // loop_body
              %v314 = vld [vmem:[%s312] sm:%s305]
              %315 = vst [vmem:[%s313] sm:%s305] %v314
            $region91: #{dilated_block.1} parent=85 // loop_footer
              %s311 = sadd.s32 1, %s307
            $region92: #{dilated_block.1} parent=85 // loop_footer_branch
              %306 = sbr.rel target = $region88
            $region93: #{dilated_block.1} parent=85 // loop_exit
              _
          $region86: #{dilated_block.1} parent=77 // pred_fallthru
            _
          // Predicated region
          $region105: #{dilated_block.1} parent=77 // pred_check
            _
          $region106: #{dilated_block.1} parent=77 // pred_check_branch
            %340 = sbr.rel (0) target = $region108
          $region107: #{dilated_block.1} parent=77 // pred_region
            %341 = vsyncadd %s295, 48
          $region108: #{dilated_block.1} parent=77 // pred_fallthru
            _
        $region78: #{dilated_block.1} parent=39 // pred_fallthru
          _
        %p342 = scmp.lt.s32.totalorder %s21, 3
        // Predicated region
        $region109: #{dilated_block.1} parent=39 // pred_check
          %p343 = pneg %p342
        $region110: #{dilated_block.1} parent=39 // pred_check_branch
          %345 = sbr.rel (%p343) target = $region112
        $region111: #{dilated_block.1} parent=39 // pred_region
          %s346 = sadd.s32 %s211, %s212
          %s347 = scalar_lea.vmem %s0, %s346
          %s348 = scalar_lea.vmem [#allocation2], 131
          %s349 = scalar_lea.sflag [#allocation3], 2
          %p351 = scmp.lt.u32.totalorder 3, 8
          %p352 = pneg %p351
          // Predicated region
          $region113: #{dilated_block.1} parent=111 // pred_check
            _
          $region114: #{dilated_block.1} parent=111 // pred_check_branch
            %354 = sbr.rel (%p351) target = $region116
          $region115: #{dilated_block.1} parent=111 // pred_region
            %s370 = sand.u32 3, 7
            %p371 = scmp.eq.s32.totalorder %s370, 0
            %p372 = pneg %p371
            // Predicated region
            $region128: #{dilated_block.1} parent=115 // pred_check
              _
            $region129: #{dilated_block.1} parent=115 // pred_check_branch
              %374 = sbr.rel (%p371) target = $region131
            $region130: #{dilated_block.1} parent=115 // pred_region
              %s375 = sand.u32 3, 7
              %s376 = ssub.s32 3, %s375
              %s377 = scalar_lea.vmem %s347, %s376
              %s378 = ssub.s32 3, %s375
              %s379 = scalar_lea.vmem %s348, %s378 [#allocation2]
              %s380 = sshll.u32 1, %s375
              %s381 = ssub.s32 %s380, 1
              loop: start=0, step=1, limit=1
              $region132: #{dilated_block.1} parent=130 // loop_pre_header
                _
              $region133: #{dilated_block.1} parent=130 // loop_header
                %s383 = sphi 0, %s387
                %p384 = scmp.ge.s32.totalorder %s383, 1
                %s388 = sphi %s377, %s377
                %s389 = sphi %s379, %s379
              $region134: #{dilated_block.1} parent=130 // loop_header_branch
                %386 = sbr.rel (%p384) target = $region138
              $region135: #{dilated_block.1} parent=130 // loop_body
                %v390 = vld [vmem:[%s388] sm:%s381]
                %391 = vst [vmem:[%s389] sm:%s381] %v390
              $region136: #{dilated_block.1} parent=130 // loop_footer
                %s387 = sadd.s32 1, %s383
              $region137: #{dilated_block.1} parent=130 // loop_footer_branch
                %382 = sbr.rel target = $region133
              $region138: #{dilated_block.1} parent=130 // loop_exit
                _
            $region131: #{dilated_block.1} parent=115 // pred_fallthru
              _
          $region116: #{dilated_block.1} parent=111 // pred_fallthru
            _
          // Predicated region
          $region117: #{dilated_block.1} parent=111 // pred_check
            %p355 = pneg %p351
          $region118: #{dilated_block.1} parent=111 // pred_check_branch
            %357 = sbr.rel (%p355) target = $region120
          $region119: #{dilated_block.1} parent=111 // pred_region
            %s358 = sshll.u32 1, 3
            %s359 = ssub.s32 %s358, 1
            loop: start=0, step=1, limit=1
            $region121: #{dilated_block.1} parent=119 // loop_pre_header
              _
            $region122: #{dilated_block.1} parent=119 // loop_header
              %s361 = sphi 0, %s365
              %p362 = scmp.ge.s32.totalorder %s361, 1
              %s366 = sphi %s347, %s347
              %s367 = sphi %s348, %s348
            $region123: #{dilated_block.1} parent=119 // loop_header_branch
              %364 = sbr.rel (%p362) target = $region127
            $region124: #{dilated_block.1} parent=119 // loop_body
              %v368 = vld [vmem:[%s366] sm:%s359]
              %369 = vst [vmem:[%s367] sm:%s359] %v368
            $region125: #{dilated_block.1} parent=119 // loop_footer
              %s365 = sadd.s32 1, %s361
            $region126: #{dilated_block.1} parent=119 // loop_footer_branch
              %360 = sbr.rel target = $region122
            $region127: #{dilated_block.1} parent=119 // loop_exit
              _
          $region120: #{dilated_block.1} parent=111 // pred_fallthru
            _
          // Predicated region
          $region139: #{dilated_block.1} parent=111 // pred_check
            _
          $region140: #{dilated_block.1} parent=111 // pred_check_branch
            %394 = sbr.rel (0) target = $region142
          $region141: #{dilated_block.1} parent=111 // pred_region
            %395 = vsyncadd %s349, 48
          $region142: #{dilated_block.1} parent=111 // pred_fallthru
            _
        $region112: #{dilated_block.1} parent=39 // pred_fallthru
          _
      $region40: #{dilated_block.1} parent=35 // pred_fallthru
        _
      %s396 = sadd.s32 %s21, 1
      %p397 = scmp.lt.s32.totalorder %s396, 4
      // Predicated region
      $region143: #{dilated_block.1} parent=35 // pred_check
        %p398 = pneg %p397
      $region144: #{dilated_block.1} parent=35 // pred_check_branch
        %400 = sbr.rel (%p398) target = $region146
      $region145: #{dilated_block.1} parent=35 // pred_region
        %s401 = smul.u32 %s396, 128
        %s402 = ssub.s32 %s401, 3
        %s403 = sadd.s32 %s401, 128
        %s404 = smul.u32 %s20, 512
        %s405 = sadd.s32 %s401, %s404
        %s406 = scalar_lea.vmem %s0, %s405
        %s407 = smul.u32 %s204, 136
        %s408 = sadd.s32 3, %s407
        %s409 = scalar_lea.vmem [#allocation2], %s408
        %s410 = smul.u32 %s204, 3
        %s411 = scalar_lea.sflag [#allocation3], %s410
        %p413 = scmp.lt.u32.totalorder 128, 8
        %p414 = pneg %p413
        // Predicated region
        $region147: #{dilated_block.1} parent=145 // pred_check
          _
        $region148: #{dilated_block.1} parent=145 // pred_check_branch
          %416 = sbr.rel (%p413) target = $region150
        $region149: #{dilated_block.1} parent=145 // pred_region
          %s432 = sand.u32 128, 7
          %p433 = scmp.eq.s32.totalorder %s432, 0
          // Predicated region
          $region162: #{dilated_block.1} parent=149 // pred_check
            %p434 = pneg %p433
          $region163: #{dilated_block.1} parent=149 // pred_check_branch
            %436 = sbr.rel (%p434) target = $region165
          $region164: #{dilated_block.1} parent=149 // pred_region
            loop: start=0, step=1, limit=1
            $region166: #{dilated_block.1} parent=164 // loop_pre_header
              _
            $region167: #{dilated_block.1} parent=164 // loop_header
              %s438 = sphi 0, %s442
              %p439 = scmp.ge.s32.totalorder %s438, 1
              %s443 = sphi %s406, %s406
              %s444 = sphi %s409, %s409
            $region168: #{dilated_block.1} parent=164 // loop_header_branch
              %441 = sbr.rel (%p439) target = $region172
            $region169: #{dilated_block.1} parent=164 // loop_body
              %v445 = vld [vmem:[%s443] sm:$0xff]
              %446 = vst [vmem:[%s444] sm:$0xff] %v445
              %v447 = vld [vmem:[%s443 + $0x8] sm:$0xff]
              %448 = vst [vmem:[%s444 + $0x8] sm:$0xff] %v447
              %v449 = vld [vmem:[%s443 + $0x10] sm:$0xff]
              %450 = vst [vmem:[%s444 + $0x10] sm:$0xff] %v449
              %v451 = vld [vmem:[%s443 + $0x18] sm:$0xff]
              %452 = vst [vmem:[%s444 + $0x18] sm:$0xff] %v451
              %v453 = vld [vmem:[%s443 + $0x20] sm:$0xff]
              %454 = vst [vmem:[%s444 + $0x20] sm:$0xff] %v453
              %v455 = vld [vmem:[%s443 + $0x28] sm:$0xff]
              %456 = vst [vmem:[%s444 + $0x28] sm:$0xff] %v455
              %v457 = vld [vmem:[%s443 + $0x30] sm:$0xff]
              %458 = vst [vmem:[%s444 + $0x30] sm:$0xff] %v457
              %v459 = vld [vmem:[%s443 + $0x38] sm:$0xff]
              %460 = vst [vmem:[%s444 + $0x38] sm:$0xff] %v459
              %v461 = vld [vmem:[%s443 + $0x40] sm:$0xff]
              %462 = vst [vmem:[%s444 + $0x40] sm:$0xff] %v461
              %v463 = vld [vmem:[%s443 + $0x48] sm:$0xff]
              %464 = vst [vmem:[%s444 + $0x48] sm:$0xff] %v463
              %v465 = vld [vmem:[%s443 + $0x50] sm:$0xff]
              %466 = vst [vmem:[%s444 + $0x50] sm:$0xff] %v465
              %v467 = vld [vmem:[%s443 + $0x58] sm:$0xff]
              %468 = vst [vmem:[%s444 + $0x58] sm:$0xff] %v467
              %v469 = vld [vmem:[%s443 + $0x60] sm:$0xff]
              %470 = vst [vmem:[%s444 + $0x60] sm:$0xff] %v469
              %v471 = vld [vmem:[%s443 + $0x68] sm:$0xff]
              %472 = vst [vmem:[%s444 + $0x68] sm:$0xff] %v471
              %v473 = vld [vmem:[%s443 + $0x70] sm:$0xff]
              %474 = vst [vmem:[%s444 + $0x70] sm:$0xff] %v473
              %v475 = vld [vmem:[%s443 + $0x78] sm:$0xff]
              %476 = vst [vmem:[%s444 + $0x78] sm:$0xff] %v475
            $region170: #{dilated_block.1} parent=164 // loop_footer
              %s442 = sadd.s32 1, %s438
            $region171: #{dilated_block.1} parent=164 // loop_footer_branch
              %437 = sbr.rel target = $region167
            $region172: #{dilated_block.1} parent=164 // loop_exit
              _
          $region165: #{dilated_block.1} parent=149 // pred_fallthru
            _
          %p477 = pneg %p433
          // Predicated region
          $region173: #{dilated_block.1} parent=149 // pred_check
            _
          $region174: #{dilated_block.1} parent=149 // pred_check_branch
            %479 = sbr.rel (%p433) target = $region176
          $region175: #{dilated_block.1} parent=149 // pred_region
            %s480 = sand.u32 128, 7
          $region176: #{dilated_block.1} parent=149 // pred_fallthru
            _
        $region150: #{dilated_block.1} parent=145 // pred_fallthru
          _
        // Predicated region
        $region151: #{dilated_block.1} parent=145 // pred_check
          %p417 = pneg %p413
        $region152: #{dilated_block.1} parent=145 // pred_check_branch
          %419 = sbr.rel (%p417) target = $region154
        $region153: #{dilated_block.1} parent=145 // pred_region
          %s420 = sshll.u32 1, 128
          %s421 = ssub.s32 %s420, 1
          loop: start=0, step=1, limit=1
          $region155: #{dilated_block.1} parent=153 // loop_pre_header
            _
          $region156: #{dilated_block.1} parent=153 // loop_header
            %s423 = sphi 0, %s427
            %p424 = scmp.ge.s32.totalorder %s423, 1
            %s428 = sphi %s406, %s406
            %s429 = sphi %s409, %s409
          $region157: #{dilated_block.1} parent=153 // loop_header_branch
            %426 = sbr.rel (%p424) target = $region161
          $region158: #{dilated_block.1} parent=153 // loop_body
            %v430 = vld [vmem:[%s428] sm:%s421]
            %431 = vst [vmem:[%s429] sm:%s421] %v430
          $region159: #{dilated_block.1} parent=153 // loop_footer
            %s427 = sadd.s32 1, %s423
          $region160: #{dilated_block.1} parent=153 // loop_footer_branch
            %422 = sbr.rel target = $region156
          $region161: #{dilated_block.1} parent=153 // loop_exit
            _
        $region154: #{dilated_block.1} parent=145 // pred_fallthru
          _
        // Predicated region
        $region177: #{dilated_block.1} parent=145 // pred_check
          _
        $region178: #{dilated_block.1} parent=145 // pred_check_branch
          %483 = sbr.rel (0) target = $region180
        $region179: #{dilated_block.1} parent=145 // pred_region
          %484 = vsyncadd %s411, 2048
        $region180: #{dilated_block.1} parent=145 // pred_fallthru
          _
        %p485 = scmp.gt.s32.totalorder %s396, 0
        // Predicated region
        $region181: #{dilated_block.1} parent=145 // pred_check
          %p486 = pneg %p485
        $region182: #{dilated_block.1} parent=145 // pred_check_branch
          %488 = sbr.rel (%p486) target = $region184
        $region183: #{dilated_block.1} parent=145 // pred_region
          %s489 = sadd.s32 %s402, %s404
          %s490 = scalar_lea.vmem %s0, %s489
          %s491 = scalar_lea.vmem [#allocation2], %s407
          %s492 = sadd.s32 1, %s410
          %s493 = scalar_lea.sflag [#allocation3], %s492
          %p495 = scmp.lt.u32.totalorder 3, 8
          %p496 = pneg %p495
          // Predicated region
          $region185: #{dilated_block.1} parent=183 // pred_check
            _
          $region186: #{dilated_block.1} parent=183 // pred_check_branch
            %498 = sbr.rel (%p495) target = $region188
          $region187: #{dilated_block.1} parent=183 // pred_region
            %s514 = sand.u32 3, 7
            %p515 = scmp.eq.s32.totalorder %s514, 0
            %p516 = pneg %p515
            // Predicated region
            $region200: #{dilated_block.1} parent=187 // pred_check
              _
            $region201: #{dilated_block.1} parent=187 // pred_check_branch
              %518 = sbr.rel (%p515) target = $region203
            $region202: #{dilated_block.1} parent=187 // pred_region
              %s519 = sand.u32 3, 7
              %s520 = ssub.s32 3, %s519
              %s521 = scalar_lea.vmem %s490, %s520
              %s522 = ssub.s32 3, %s519
              %s523 = scalar_lea.vmem %s491, %s522 [#allocation2]
              %s524 = sshll.u32 1, %s519
              %s525 = ssub.s32 %s524, 1
              loop: start=0, step=1, limit=1
              $region204: #{dilated_block.1} parent=202 // loop_pre_header
                _
              $region205: #{dilated_block.1} parent=202 // loop_header
                %s527 = sphi 0, %s531
                %p528 = scmp.ge.s32.totalorder %s527, 1
                %s532 = sphi %s521, %s521
                %s533 = sphi %s523, %s523
              $region206: #{dilated_block.1} parent=202 // loop_header_branch
                %530 = sbr.rel (%p528) target = $region210
              $region207: #{dilated_block.1} parent=202 // loop_body
                %v534 = vld [vmem:[%s532] sm:%s525]
                %535 = vst [vmem:[%s533] sm:%s525] %v534
              $region208: #{dilated_block.1} parent=202 // loop_footer
                %s531 = sadd.s32 1, %s527
              $region209: #{dilated_block.1} parent=202 // loop_footer_branch
                %526 = sbr.rel target = $region205
              $region210: #{dilated_block.1} parent=202 // loop_exit
                _
            $region203: #{dilated_block.1} parent=187 // pred_fallthru
              _
          $region188: #{dilated_block.1} parent=183 // pred_fallthru
            _
          // Predicated region
          $region189: #{dilated_block.1} parent=183 // pred_check
            %p499 = pneg %p495
          $region190: #{dilated_block.1} parent=183 // pred_check_branch
            %501 = sbr.rel (%p499) target = $region192
          $region191: #{dilated_block.1} parent=183 // pred_region
            %s502 = sshll.u32 1, 3
            %s503 = ssub.s32 %s502, 1
            loop: start=0, step=1, limit=1
            $region193: #{dilated_block.1} parent=191 // loop_pre_header
              _
            $region194: #{dilated_block.1} parent=191 // loop_header
              %s505 = sphi 0, %s509
              %p506 = scmp.ge.s32.totalorder %s505, 1
              %s510 = sphi %s490, %s490
              %s511 = sphi %s491, %s491
            $region195: #{dilated_block.1} parent=191 // loop_header_branch
              %508 = sbr.rel (%p506) target = $region199
            $region196: #{dilated_block.1} parent=191 // loop_body
              %v512 = vld [vmem:[%s510] sm:%s503]
              %513 = vst [vmem:[%s511] sm:%s503] %v512
            $region197: #{dilated_block.1} parent=191 // loop_footer
              %s509 = sadd.s32 1, %s505
            $region198: #{dilated_block.1} parent=191 // loop_footer_branch
              %504 = sbr.rel target = $region194
            $region199: #{dilated_block.1} parent=191 // loop_exit
              _
          $region192: #{dilated_block.1} parent=183 // pred_fallthru
            _
          // Predicated region
          $region211: #{dilated_block.1} parent=183 // pred_check
            _
          $region212: #{dilated_block.1} parent=183 // pred_check_branch
            %538 = sbr.rel (0) target = $region214
          $region213: #{dilated_block.1} parent=183 // pred_region
            %539 = vsyncadd %s493, 48
          $region214: #{dilated_block.1} parent=183 // pred_fallthru
            _
        $region184: #{dilated_block.1} parent=145 // pred_fallthru
          _
        %p540 = scmp.lt.s32.totalorder %s396, 3
        // Predicated region
        $region215: #{dilated_block.1} parent=145 // pred_check
          %p541 = pneg %p540
        $region216: #{dilated_block.1} parent=145 // pred_check_branch
          %543 = sbr.rel (%p541) target = $region218
        $region217: #{dilated_block.1} parent=145 // pred_region
          %s544 = sadd.s32 %s403, %s404
          %s545 = scalar_lea.vmem %s0, %s544
          %s546 = sadd.s32 131, %s407
          %s547 = scalar_lea.vmem [#allocation2], %s546
          %s548 = sadd.s32 2, %s410
          %s549 = scalar_lea.sflag [#allocation3], %s548
          %p551 = scmp.lt.u32.totalorder 3, 8
          %p552 = pneg %p551
          // Predicated region
          $region219: #{dilated_block.1} parent=217 // pred_check
            _
          $region220: #{dilated_block.1} parent=217 // pred_check_branch
            %554 = sbr.rel (%p551) target = $region222
          $region221: #{dilated_block.1} parent=217 // pred_region
            %s570 = sand.u32 3, 7
            %p571 = scmp.eq.s32.totalorder %s570, 0
            %p572 = pneg %p571
            // Predicated region
            $region234: #{dilated_block.1} parent=221 // pred_check
              _
            $region235: #{dilated_block.1} parent=221 // pred_check_branch
              %574 = sbr.rel (%p571) target = $region237
            $region236: #{dilated_block.1} parent=221 // pred_region
              %s575 = sand.u32 3, 7
              %s576 = ssub.s32 3, %s575
              %s577 = scalar_lea.vmem %s545, %s576
              %s578 = ssub.s32 3, %s575
              %s579 = scalar_lea.vmem %s547, %s578 [#allocation2]
              %s580 = sshll.u32 1, %s575
              %s581 = ssub.s32 %s580, 1
              loop: start=0, step=1, limit=1
              $region238: #{dilated_block.1} parent=236 // loop_pre_header
                _
              $region239: #{dilated_block.1} parent=236 // loop_header
                %s583 = sphi 0, %s587
                %p584 = scmp.ge.s32.totalorder %s583, 1
                %s588 = sphi %s577, %s577
                %s589 = sphi %s579, %s579
              $region240: #{dilated_block.1} parent=236 // loop_header_branch
                %586 = sbr.rel (%p584) target = $region244
              $region241: #{dilated_block.1} parent=236 // loop_body
                %v590 = vld [vmem:[%s588] sm:%s581]
                %591 = vst [vmem:[%s589] sm:%s581] %v590
              $region242: #{dilated_block.1} parent=236 // loop_footer
                %s587 = sadd.s32 1, %s583
              $region243: #{dilated_block.1} parent=236 // loop_footer_branch
                %582 = sbr.rel target = $region239
              $region244: #{dilated_block.1} parent=236 // loop_exit
                _
            $region237: #{dilated_block.1} parent=221 // pred_fallthru
              _
          $region222: #{dilated_block.1} parent=217 // pred_fallthru
            _
          // Predicated region
          $region223: #{dilated_block.1} parent=217 // pred_check
            %p555 = pneg %p551
          $region224: #{dilated_block.1} parent=217 // pred_check_branch
            %557 = sbr.rel (%p555) target = $region226
          $region225: #{dilated_block.1} parent=217 // pred_region
            %s558 = sshll.u32 1, 3
            %s559 = ssub.s32 %s558, 1
            loop: start=0, step=1, limit=1
            $region227: #{dilated_block.1} parent=225 // loop_pre_header
              _
            $region228: #{dilated_block.1} parent=225 // loop_header
              %s561 = sphi 0, %s565
              %p562 = scmp.ge.s32.totalorder %s561, 1
              %s566 = sphi %s545, %s545
              %s567 = sphi %s547, %s547
            $region229: #{dilated_block.1} parent=225 // loop_header_branch
              %564 = sbr.rel (%p562) target = $region233
            $region230: #{dilated_block.1} parent=225 // loop_body
              %v568 = vld [vmem:[%s566] sm:%s559]
              %569 = vst [vmem:[%s567] sm:%s559] %v568
            $region231: #{dilated_block.1} parent=225 // loop_footer
              %s565 = sadd.s32 1, %s561
            $region232: #{dilated_block.1} parent=225 // loop_footer_branch
              %560 = sbr.rel target = $region228
            $region233: #{dilated_block.1} parent=225 // loop_exit
              _
          $region226: #{dilated_block.1} parent=217 // pred_fallthru
            _
          // Predicated region
          $region245: #{dilated_block.1} parent=217 // pred_check
            _
          $region246: #{dilated_block.1} parent=217 // pred_check_branch
            %594 = sbr.rel (0) target = $region248
          $region247: #{dilated_block.1} parent=217 // pred_region
            %595 = vsyncadd %s549, 48
          $region248: #{dilated_block.1} parent=217 // pred_fallthru
            _
        $region218: #{dilated_block.1} parent=145 // pred_fallthru
          _
      $region146: #{dilated_block.1} parent=35 // pred_fallthru
        _
      %s596 = smul.u32 %s203, 3
      %s597 = scalar_lea.sflag [#allocation3], %s596
      %s598 = smul.u32 128, 1
      %s599 = sshll.u32 %s598, 4
      %600 = dma.done %s597, %s599
      %p601 = scmp.gt.s32.totalorder %s21, 0
      // Predicated region
      $region249: #{dilated_block.1} parent=35 // pred_check
        %p602 = pneg %p601
      $region250: #{dilated_block.1} parent=35 // pred_check_branch
        %604 = sbr.rel (%p602) target = $region252
      $region251: #{dilated_block.1} parent=35 // pred_region
        %s605 = sadd.s32 1, %s596
        %s606 = scalar_lea.sflag [#allocation3], %s605
        %s607 = smul.u32 3, 1
        %s608 = sshll.u32 %s607, 4
        %609 = dma.done %s606, %s608
      $region252: #{dilated_block.1} parent=35 // pred_fallthru
        _
      %p610 = scmp.lt.s32.totalorder %s21, 3
      // Predicated region
      $region253: #{dilated_block.1} parent=35 // pred_check
        %p611 = pneg %p610
      $region254: #{dilated_block.1} parent=35 // pred_check_branch
        %613 = sbr.rel (%p611) target = $region256
      $region255: #{dilated_block.1} parent=35 // pred_region
        %s614 = sadd.s32 2, %s596
        %s615 = scalar_lea.sflag [#allocation3], %s614
        %s616 = smul.u32 3, 1
        %s617 = sshll.u32 %s616, 4
        %618 = dma.done %s615, %s617
      $region256: #{dilated_block.1} parent=35 // pred_fallthru
        _
      // Predicated region
      $region257: #{dilated_block.1} parent=35 // pred_check
        %p619 = pneg %p205
      $region258: #{dilated_block.1} parent=35 // pred_check_branch
        %621 = sbr.rel (%p619) target = $region260
      $region259: #{dilated_block.1} parent=35 // pred_region
        %s622 = smul.u32 %s203, 136
        %s623 = scalar_lea.vmem [#allocation2], %s622
        %624 = vst [vmem:[%s623] sm:$0x7] 0.0
      $region260: #{dilated_block.1} parent=35 // pred_fallthru
        _
      %p625 = scmp.eq.s32.totalorder %s21, 3
      // Predicated region
      $region261: #{dilated_block.1} parent=35 // pred_check
        %p626 = pneg %p625
      $region262: #{dilated_block.1} parent=35 // pred_check_branch
        %628 = sbr.rel (%p626) target = $region264
      $region263: #{dilated_block.1} parent=35 // pred_region
        %s629 = smul.u32 %s203, 136
        %s630 = scalar_lea.vmem [#allocation2], %s629
        %631 = vst [vmem:[%s630 + $0x83] sm:$0x7] 0.0
      $region264: #{dilated_block.1} parent=35 // pred_fallthru
        _
      %s632 = smul.u32 %s203, 136
      %s633 = scalar_lea.vmem [#allocation2], %s632
      %v634 = vld [vmem:[%s633] sm:$0xff]
      %v635 = vld [vmem:[%s633 + $0x8] sm:$0xff]
      %v636 = vld [vmem:[%s633 + $0x10] sm:$0xff]
      %v637 = vld [vmem:[%s633 + $0x18] sm:$0xff]
      %v638 = vld [vmem:[%s633 + $0x20] sm:$0xff]
      %v639 = vld [vmem:[%s633 + $0x28] sm:$0xff]
      %v640 = vld [vmem:[%s633 + $0x30] sm:$0xff]
      %v641 = vld [vmem:[%s633 + $0x38] sm:$0xff]
      %v642 = vld [vmem:[%s633 + $0x40] sm:$0xff]
      %v643 = vld [vmem:[%s633 + $0x48] sm:$0xff]
      %v644 = vld [vmem:[%s633 + $0x50] sm:$0xff]
      %v645 = vld [vmem:[%s633 + $0x58] sm:$0xff]
      %v646 = vld [vmem:[%s633 + $0x60] sm:$0xff]
      %v647 = vld [vmem:[%s633 + $0x68] sm:$0xff]
      %v648 = vld [vmem:[%s633 + $0x70] sm:$0xff]
      %v649 = vld [vmem:[%s633 + $0x78] sm:$0xff]
      %v650 = vld [vmem:[%s633 + $0x3] sm:$0xff]
      %v651 = vld [vmem:[%s633 + $0xb] sm:$0xff]
      %v652 = vld [vmem:[%s633 + $0x13] sm:$0xff]
      %v653 = vld [vmem:[%s633 + $0x1b] sm:$0xff]
      %v654 = vld [vmem:[%s633 + $0x23] sm:$0xff]
      %v655 = vld [vmem:[%s633 + $0x2b] sm:$0xff]
      %v656 = vld [vmem:[%s633 + $0x33] sm:$0xff]
      %v657 = vld [vmem:[%s633 + $0x3b] sm:$0xff]
      %v658 = vld [vmem:[%s633 + $0x43] sm:$0xff]
      %v659 = vld [vmem:[%s633 + $0x4b] sm:$0xff]
      %v660 = vld [vmem:[%s633 + $0x53] sm:$0xff]
      %v661 = vld [vmem:[%s633 + $0x5b] sm:$0xff]
      %v662 = vld [vmem:[%s633 + $0x63] sm:$0xff]
      %v663 = vld [vmem:[%s633 + $0x6b] sm:$0xff]
      %v664 = vld [vmem:[%s633 + $0x73] sm:$0xff]
      %v665 = vld [vmem:[%s633 + $0x7b] sm:$0xff]
      %v666 = vld [vmem:[%s633 + $0x6] sm:$0xff]
      %v667 = vld [vmem:[%s633 + $0xe] sm:$0xff]
      %v668 = vld [vmem:[%s633 + $0x16] sm:$0xff]
      %v669 = vld [vmem:[%s633 + $0x1e] sm:$0xff]
      %v670 = vld [vmem:[%s633 + $0x26] sm:$0xff]
      %v671 = vld [vmem:[%s633 + $0x2e] sm:$0xff]
      %v672 = vld [vmem:[%s633 + $0x36] sm:$0xff]
      %v673 = vld [vmem:[%s633 + $0x3e] sm:$0xff]
      %v674 = vld [vmem:[%s633 + $0x46] sm:$0xff]
      %v675 = vld [vmem:[%s633 + $0x4e] sm:$0xff]
      %v676 = vld [vmem:[%s633 + $0x56] sm:$0xff]
      %v677 = vld [vmem:[%s633 + $0x5e] sm:$0xff]
      %v678 = vld [vmem:[%s633 + $0x66] sm:$0xff]
      %v679 = vld [vmem:[%s633 + $0x6e] sm:$0xff]
      %v680 = vld [vmem:[%s633 + $0x76] sm:$0xff]
      %v681 = vld [vmem:[%s633 + $0x7e] sm:$0xff]
      %v682 = vpack.c.bf16 %v635, %v634
      %v683 = vpack.c.bf16 %v637, %v636
      %v684 = vpack.c.bf16 %v639, %v638
      %v685 = vpack.c.bf16 %v641, %v640
      %v686 = vpack.c.bf16 %v643, %v642
      %v687 = vpack.c.bf16 %v645, %v644
      %v688 = vpack.c.bf16 %v647, %v646
      %v689 = vpack.c.bf16 %v649, %v648
      %v690 = vpack.c.bf16 %v651, %v650
      %v691 = vpack.c.bf16 %v653, %v652
      %v692 = vpack.c.bf16 %v655, %v654
      %v693 = vpack.c.bf16 %v657, %v656
      %v694 = vpack.c.bf16 %v659, %v658
      %v695 = vpack.c.bf16 %v661, %v660
      %v696 = vpack.c.bf16 %v663, %v662
      %v697 = vpack.c.bf16 %v665, %v664
      %v698 = vpack.c.bf16 %v667, %v666
      %v699 = vpack.c.bf16 %v669, %v668
      %v700 = vpack.c.bf16 %v671, %v670
      %v701 = vpack.c.bf16 %v673, %v672
      %v702 = vpack.c.bf16 %v675, %v674
      %v703 = vpack.c.bf16 %v677, %v676
      %v704 = vpack.c.bf16 %v679, %v678
      %v705 = vpack.c.bf16 %v681, %v680
      %v706 = vld [vmem:[%s1] sm:$0xf]
      %v707 = vld [vmem:[%s1 + $0x4] sm:$0xf]
      %v708 = vld [vmem:[%s1 + $0x8] sm:$0xf]
      %v709 = vld [vmem:[%s1 + $0xc] sm:$0xf]
      %v710 = vld [vmem:[%s1 + $0x10] sm:$0xf]
      %v711 = vld [vmem:[%s1 + $0x14] sm:$0xf]
      %v712 = vld [vmem:[%s1 + $0x18] sm:$0xf]
      %v713 = vld [vmem:[%s1 + $0x1c] sm:$0xf]
      %v714 = vld [vmem:[%s1 + $0x20] sm:$0xf]
      %v715 = vld [vmem:[%s1 + $0x24] sm:$0xf]
      %v716 = vld [vmem:[%s1 + $0x28] sm:$0xf]
      %v717 = vld [vmem:[%s1 + $0x2c] sm:$0xf]
      %v718 = vld [vmem:[%s1 + $0x30] sm:$0xf]
      %v719 = vld [vmem:[%s1 + $0x34] sm:$0xf]
      %v720 = vld [vmem:[%s1 + $0x38] sm:$0xf]
      %v721 = vld [vmem:[%s1 + $0x3c] sm:$0xf]
      %v722 = vld [vmem:[%s1 + $0x40] sm:$0xf]
      %v723 = vld [vmem:[%s1 + $0x44] sm:$0xf]
      %v724 = vld [vmem:[%s1 + $0x48] sm:$0xf]
      %v725 = vld [vmem:[%s1 + $0x4c] sm:$0xf]
      %v726 = vld [vmem:[%s1 + $0x50] sm:$0xf]
      %v727 = vld [vmem:[%s1 + $0x54] sm:$0xf]
      %v728 = vld [vmem:[%s1 + $0x58] sm:$0xf]
      %v729 = vld [vmem:[%s1 + $0x5c] sm:$0xf]
      %v730 = vld [vmem:[%s1 + $0x60] sm:$0xf]
      %v731 = vld [vmem:[%s1 + $0x64] sm:$0xf]
      %v732 = vld [vmem:[%s1 + $0x68] sm:$0xf]
      %v733 = vld [vmem:[%s1 + $0x6c] sm:$0xf]
      %v734 = vld [vmem:[%s1 + $0x70] sm:$0xf]
      %v735 = vld [vmem:[%s1 + $0x74] sm:$0xf]
      %v736 = vld [vmem:[%s1 + $0x78] sm:$0xf]
      %v737 = vld [vmem:[%s1 + $0x7c] sm:$0xf]
      %v738 = vld [vmem:[%s1 + $0x80] sm:$0xf]
      %v739 = vld [vmem:[%s1 + $0x84] sm:$0xf]
      %v740 = vld [vmem:[%s1 + $0x88] sm:$0xf]
      %v741 = vld [vmem:[%s1 + $0x8c] sm:$0xf]
      %v742 = vld [vmem:[%s1 + $0x90] sm:$0xf]
      %v743 = vld [vmem:[%s1 + $0x94] sm:$0xf]
      %v744 = vld [vmem:[%s1 + $0x98] sm:$0xf]
      %v745 = vld [vmem:[%s1 + $0x9c] sm:$0xf]
      %v746 = vld [vmem:[%s1 + $0xa0] sm:$0xf]
      %v747 = vld [vmem:[%s1 + $0xa4] sm:$0xf]
      %v748 = vld [vmem:[%s1 + $0xa8] sm:$0xf]
      %v749 = vld [vmem:[%s1 + $0xac] sm:$0xf]
      %v750 = vld [vmem:[%s1 + $0xb0] sm:$0xf]
      %v751 = vld [vmem:[%s1 + $0xb4] sm:$0xf]
      %v752 = vld [vmem:[%s1 + $0xb8] sm:$0xf]
      %v753 = vld [vmem:[%s1 + $0xbc] sm:$0xf]
      %v754 = vld [vmem:[%s2] sm:$0x1]
      %v756 = vlaneseq
      %v757 = vshrl.u32 %v756, 7
      %v758 = vsub.s32 0, %v757
      %v759 = vrot.slane %v754, %v758
      %v809 = vunpack.c.l.b16 %v706
      %v810 = vunpack.c.l.b16 %v707
      %v811 = vunpack.c.l.b16 %v708
      %v812 = vunpack.c.l.b16 %v709
      %v813 = vunpack.c.l.b16 %v710
      %v814 = vunpack.c.l.b16 %v711
      %v815 = vunpack.c.l.b16 %v712
      %v816 = vunpack.c.l.b16 %v713
      %v817 = vunpack.c.l.b16 %v714
      %v818 = vunpack.c.l.b16 %v715
      %v819 = vunpack.c.l.b16 %v716
      %v820 = vunpack.c.l.b16 %v717
      %v821 = vunpack.c.l.b16 %v718
      %v822 = vunpack.c.l.b16 %v719
      %v823 = vunpack.c.l.b16 %v720
      %v824 = vunpack.c.l.b16 %v721
      %v825 = vunpack.c.l.b16 %v722
      %v826 = vunpack.c.l.b16 %v723
      %v827 = vunpack.c.l.b16 %v724
      %v828 = vunpack.c.l.b16 %v725
      %v829 = vunpack.c.l.b16 %v726
      %v830 = vunpack.c.l.b16 %v727
      %v831 = vunpack.c.l.b16 %v728
      %v832 = vunpack.c.l.b16 %v729
      %v833 = vunpack.c.l.b16 %v730
      %v834 = vunpack.c.l.b16 %v731
      %v835 = vunpack.c.l.b16 %v732
      %v836 = vunpack.c.l.b16 %v733
      %v837 = vunpack.c.l.b16 %v734
      %v838 = vunpack.c.l.b16 %v735
      %v839 = vunpack.c.l.b16 %v736
      %v840 = vunpack.c.l.b16 %v737
      %v841 = vunpack.c.l.b16 %v738
      %v842 = vunpack.c.l.b16 %v739
      %v843 = vunpack.c.l.b16 %v740
      %v844 = vunpack.c.l.b16 %v741
      %v845 = vunpack.c.l.b16 %v742
      %v846 = vunpack.c.l.b16 %v743
      %v847 = vunpack.c.l.b16 %v744
      %v848 = vunpack.c.l.b16 %v745
      %v849 = vunpack.c.l.b16 %v746
      %v850 = vunpack.c.l.b16 %v747
      %v851 = vunpack.c.l.b16 %v748
      %v852 = vunpack.c.l.b16 %v749
      %v853 = vunpack.c.l.b16 %v750
      %v854 = vunpack.c.l.b16 %v751
      %v855 = vunpack.c.l.b16 %v752
      %v856 = vunpack.c.l.b16 %v753
      %v857 = vpack.c.b16 %v810, %v809
      %v858 = vpack.c.b16 %v812, %v811
      %v859 = vpack.c.b16 %v814, %v813
      %v860 = vpack.c.b16 %v816, %v815
      %v861 = vpack.c.b16 %v818, %v817
      %v862 = vpack.c.b16 %v820, %v819
      %v863 = vpack.c.b16 %v822, %v821
      %v864 = vpack.c.b16 %v824, %v823
      %v865 = vpack.c.b16 %v826, %v825
      %v866 = vpack.c.b16 %v828, %v827
      %v867 = vpack.c.b16 %v830, %v829
      %v868 = vpack.c.b16 %v832, %v831
      %v869 = vpack.c.b16 %v834, %v833
      %v870 = vpack.c.b16 %v836, %v835
      %v871 = vpack.c.b16 %v838, %v837
      %v872 = vpack.c.b16 %v840, %v839
      %v873 = vpack.c.b16 %v842, %v841
      %v874 = vpack.c.b16 %v844, %v843
      %v875 = vpack.c.b16 %v846, %v845
      %v876 = vpack.c.b16 %v848, %v847
      %v877 = vpack.c.b16 %v850, %v849
      %v878 = vpack.c.b16 %v852, %v851
      %v879 = vpack.c.b16 %v854, %v853
      %v880 = vpack.c.b16 %v856, %v855
      %905 = vmatprep.subr.bf16.mxu0 0
      %906 = vmatpush1.bf16.msra.mxu0 %v864
      %907 = vmatprep.subr.bf16.mxu0 0
      %908 = vmatpush1.bf16.msra.mxu0 %v863
      %909 = vmatprep.subr.bf16.mxu0 0
      %910 = vmatpush1.bf16.msra.mxu0 %v862
      %911 = vmatprep.subr.bf16.mxu0 0
      %912 = vmatpush1.bf16.msra.mxu0 %v861
      %913 = vmatprep.subr.bf16.mxu0 0
      %914 = vmatpush1.bf16.msra.mxu0 %v860
      %915 = vmatprep.subr.bf16.mxu0 0
      %916 = vmatpush1.bf16.msra.mxu0 %v859
      %917 = vmatprep.subr.bf16.mxu0 0
      %918 = vmatpush1.bf16.msra.mxu0 %v858
      %919 = vmatprep.subr.bf16.mxu0 0
      %920 = vmatpush1.bf16.msra.mxu0 %v857
      %921 = vmatprep.subr.bf16.mxu0 0
      %922 = vmatpush2.bf16.msra.mxu0 %v872
      %923 = vmatprep.subr.bf16.mxu0 0
      %924 = vmatpush2.bf16.msra.mxu0 %v871
      %925 = vmatprep.subr.bf16.mxu0 0
      %926 = vmatpush2.bf16.msra.mxu0 %v870
      %927 = vmatprep.subr.bf16.mxu0 0
      %928 = vmatpush2.bf16.msra.mxu0 %v869
      %929 = vmatprep.subr.bf16.mxu0 0
      %930 = vmatpush2.bf16.msra.mxu0 %v868
      %931 = vmatprep.subr.bf16.mxu0 0
      %932 = vmatpush2.bf16.msra.mxu0 %v867
      %933 = vmatprep.subr.bf16.mxu0 0
      %934 = vmatpush2.bf16.msra.mxu0 %v866
      %935 = vmatprep.subr.bf16.mxu0 0
      %936 = vmatpush2.bf16.msra.mxu0 %v865
      %937 = vmatprep.mubr.bf16.mxu0 %v690
      %938 = vmatmul.mubr.bf16.gmra.mxu0 %v682
      %v939 = vpop.f32.mrf.mxu0
      %v940 = vadd.f32 %v759, %v939
      %v941 = vpop.f32.mrf.mxu0
      %v942 = vpop.f32.mrf.mxu0
      %v943 = vadd.f32 %v759, %v942
      %v944 = vpop.f32.mrf.mxu0
      %945 = vmatprep.mubr.bf16.mxu0 %v691
      %946 = vmatmul.mubr.bf16.gmra.mxu0 %v683
      %v947 = vpop.f32.mrf.mxu0
      %v948 = vadd.f32 %v759, %v947
      %v949 = vpop.f32.mrf.mxu0
      %v950 = vpop.f32.mrf.mxu0
      %v951 = vadd.f32 %v759, %v950
      %v952 = vpop.f32.mrf.mxu0
      %953 = vmatprep.mubr.bf16.mxu0 %v692
      %954 = vmatmul.mubr.bf16.gmra.mxu0 %v684
      %v955 = vpop.f32.mrf.mxu0
      %v956 = vadd.f32 %v759, %v955
      %v957 = vpop.f32.mrf.mxu0
      %v958 = vpop.f32.mrf.mxu0
      %v959 = vadd.f32 %v759, %v958
      %v960 = vpop.f32.mrf.mxu0
      %961 = vmatprep.mubr.bf16.mxu0 %v693
      %962 = vmatmul.mubr.bf16.gmra.mxu0 %v685
      %v963 = vpop.f32.mrf.mxu0
      %v964 = vadd.f32 %v759, %v963
      %v965 = vpop.f32.mrf.mxu0
      %v966 = vpop.f32.mrf.mxu0
      %v967 = vadd.f32 %v759, %v966
      %v968 = vpop.f32.mrf.mxu0
      %969 = vmatprep.mubr.bf16.mxu0 %v694
      %970 = vmatmul.mubr.bf16.gmra.mxu0 %v686
      %v971 = vpop.f32.mrf.mxu0
      %v972 = vadd.f32 %v759, %v971
      %v973 = vpop.f32.mrf.mxu0
      %v974 = vpop.f32.mrf.mxu0
      %v975 = vadd.f32 %v759, %v974
      %v976 = vpop.f32.mrf.mxu0
      %977 = vmatprep.mubr.bf16.mxu0 %v695
      %978 = vmatmul.mubr.bf16.gmra.mxu0 %v687
      %v979 = vpop.f32.mrf.mxu0
      %v980 = vadd.f32 %v759, %v979
      %v981 = vpop.f32.mrf.mxu0
      %v982 = vpop.f32.mrf.mxu0
      %v983 = vadd.f32 %v759, %v982
      %v984 = vpop.f32.mrf.mxu0
      %985 = vmatprep.mubr.bf16.mxu0 %v696
      %986 = vmatmul.mubr.bf16.gmra.mxu0 %v688
      %v987 = vpop.f32.mrf.mxu0
      %v988 = vadd.f32 %v759, %v987
      %v989 = vpop.f32.mrf.mxu0
      %v990 = vpop.f32.mrf.mxu0
      %v991 = vadd.f32 %v759, %v990
      %v992 = vpop.f32.mrf.mxu0
      %993 = vmatprep.mubr.bf16.mxu0 %v697
      %994 = vmatmul.mubr.bf16.gmra.mxu0 %v689
      %v995 = vpop.f32.mrf.mxu0
      %v996 = vadd.f32 %v759, %v995
      %v997 = vpop.f32.mrf.mxu0
      %v998 = vpop.f32.mrf.mxu0
      %v999 = vadd.f32 %v759, %v998
      %v1000 = vpop.f32.mrf.mxu0
      %1001 = vdwg.mxu0
      %1002 = vmatprep.subr.bf16.mxu0 0
      %1003 = vmatpush1.bf16.msra.mxu0 %v880
      %1004 = vmatprep.subr.bf16.mxu0 0
      %1005 = vmatpush1.bf16.msra.mxu0 %v879
      %1006 = vmatprep.subr.bf16.mxu0 0
      %1007 = vmatpush1.bf16.msra.mxu0 %v878
      %1008 = vmatprep.subr.bf16.mxu0 0
      %1009 = vmatpush1.bf16.msra.mxu0 %v877
      %1010 = vmatprep.subr.bf16.mxu0 0
      %1011 = vmatpush1.bf16.msra.mxu0 %v876
      %1012 = vmatprep.subr.bf16.mxu0 0
      %1013 = vmatpush1.bf16.msra.mxu0 %v875
      %1014 = vmatprep.subr.bf16.mxu0 0
      %1015 = vmatpush1.bf16.msra.mxu0 %v874
      %1016 = vmatprep.subr.bf16.mxu0 0
      %1017 = vmatpush1.bf16.msra.mxu0 %v873
      %1018 = vmatprep.subr.bf16.mxu0 0
      %1019 = vmatpush2.bf16.msra.mxu0 0
      %1020 = vmatprep.subr.bf16.mxu0 0
      %1021 = vmatpush2.bf16.msra.mxu0 0
      %1022 = vmatprep.subr.bf16.mxu0 0
      %1023 = vmatpush2.bf16.msra.mxu0 0
      %1024 = vmatprep.subr.bf16.mxu0 0
      %1025 = vmatpush2.bf16.msra.mxu0 0
      %1026 = vmatprep.subr.bf16.mxu0 0
      %1027 = vmatpush2.bf16.msra.mxu0 0
      %1028 = vmatprep.subr.bf16.mxu0 0
      %1029 = vmatpush2.bf16.msra.mxu0 0
      %1030 = vmatprep.subr.bf16.mxu0 0
      %1031 = vmatpush2.bf16.msra.mxu0 0
      %1032 = vmatprep.subr.bf16.mxu0 0
      %1033 = vmatpush2.bf16.msra.mxu0 0
      %1034 = vmatprep.mubr.bf16.mxu0 0
      %1035 = vmatmul.mubr.bf16.gmra.mxu0 %v698
      %v1036 = vpop.f32.mrf.mxu0
      %v1037 = vadd.f32 %v940, %v1036
      %v1038 = vpop.f32.mrf.mxu0
      %v1039 = vpop.f32.mrf.mxu0
      %v1040 = vadd.f32 %v943, %v1039
      %v1041 = vpop.f32.mrf.mxu0
      %1042 = vmatprep.mubr.bf16.mxu0 0
      %1043 = vmatmul.mubr.bf16.gmra.mxu0 %v699
      %v1044 = vpop.f32.mrf.mxu0
      %v1045 = vadd.f32 %v948, %v1044
      %v1046 = vpop.f32.mrf.mxu0
      %v1047 = vpop.f32.mrf.mxu0
      %v1048 = vadd.f32 %v951, %v1047
      %v1049 = vpop.f32.mrf.mxu0
      %1050 = vmatprep.mubr.bf16.mxu0 0
      %1051 = vmatmul.mubr.bf16.gmra.mxu0 %v700
      %v1052 = vpop.f32.mrf.mxu0
      %v1053 = vadd.f32 %v956, %v1052
      %v1054 = vpop.f32.mrf.mxu0
      %v1055 = vpop.f32.mrf.mxu0
      %v1056 = vadd.f32 %v959, %v1055
      %v1057 = vpop.f32.mrf.mxu0
      %1058 = vmatprep.mubr.bf16.mxu0 0
      %1059 = vmatmul.mubr.bf16.gmra.mxu0 %v701
      %v1060 = vpop.f32.mrf.mxu0
      %v1061 = vadd.f32 %v964, %v1060
      %v1062 = vpop.f32.mrf.mxu0
      %v1063 = vpop.f32.mrf.mxu0
      %v1064 = vadd.f32 %v967, %v1063
      %v1065 = vpop.f32.mrf.mxu0
      %1066 = vmatprep.mubr.bf16.mxu0 0
      %1067 = vmatmul.mubr.bf16.gmra.mxu0 %v702
      %v1068 = vpop.f32.mrf.mxu0
      %v1069 = vadd.f32 %v972, %v1068
      %v1070 = vpop.f32.mrf.mxu0
      %v1071 = vpop.f32.mrf.mxu0
      %v1072 = vadd.f32 %v975, %v1071
      %v1073 = vpop.f32.mrf.mxu0
      %1074 = vmatprep.mubr.bf16.mxu0 0
      %1075 = vmatmul.mubr.bf16.gmra.mxu0 %v703
      %v1076 = vpop.f32.mrf.mxu0
      %v1077 = vadd.f32 %v980, %v1076
      %v1078 = vpop.f32.mrf.mxu0
      %v1079 = vpop.f32.mrf.mxu0
      %v1080 = vadd.f32 %v983, %v1079
      %v1081 = vpop.f32.mrf.mxu0
      %1082 = vmatprep.mubr.bf16.mxu0 0
      %1083 = vmatmul.mubr.bf16.gmra.mxu0 %v704
      %v1084 = vpop.f32.mrf.mxu0
      %v1085 = vadd.f32 %v988, %v1084
      %v1086 = vpop.f32.mrf.mxu0
      %v1087 = vpop.f32.mrf.mxu0
      %v1088 = vadd.f32 %v991, %v1087
      %v1089 = vpop.f32.mrf.mxu0
      %1090 = vmatprep.mubr.bf16.mxu0 0
      %1091 = vmatmul.mubr.bf16.gmra.mxu0 %v705
      %v1092 = vpop.f32.mrf.mxu0
      %v1093 = vadd.f32 %v996, %v1092
      %v1094 = vpop.f32.mrf.mxu0
      %v1095 = vpop.f32.mrf.mxu0
      %v1096 = vadd.f32 %v999, %v1095
      %v1097 = vpop.f32.mrf.mxu0
      %1098 = vdwg.mxu0
      %v1099 = vpack.c.bf16 %v1040, %v1037
      %v1100 = vpack.c.bf16 %v1048, %v1045
      %v1101 = vpack.c.bf16 %v1056, %v1053
      %v1102 = vpack.c.bf16 %v1064, %v1061
      %v1103 = vpack.c.bf16 %v1072, %v1069
      %v1104 = vpack.c.bf16 %v1080, %v1077
      %v1105 = vpack.c.bf16 %v1088, %v1085
      %v1106 = vpack.c.bf16 %v1096, %v1093
      %v1107 = vld [vmem:[%s3] sm:$0xf]
      %v1108 = vld [vmem:[%s3 + $0x4] sm:$0xf]
      %v1109 = vld [vmem:[%s3 + $0x8] sm:$0xf]
      %v1110 = vld [vmem:[%s3 + $0xc] sm:$0xf]
      %v1111 = vld [vmem:[%s3 + $0x10] sm:$0xf]
      %v1112 = vld [vmem:[%s3 + $0x14] sm:$0xf]
      %v1113 = vld [vmem:[%s3 + $0x18] sm:$0xf]
      %v1114 = vld [vmem:[%s3 + $0x1c] sm:$0xf]
      %v1115 = vld [vmem:[%s3 + $0x20] sm:$0xf]
      %v1116 = vld [vmem:[%s3 + $0x24] sm:$0xf]
      %v1117 = vld [vmem:[%s3 + $0x28] sm:$0xf]
      %v1118 = vld [vmem:[%s3 + $0x2c] sm:$0xf]
      %v1119 = vld [vmem:[%s3 + $0x30] sm:$0xf]
      %v1120 = vld [vmem:[%s3 + $0x34] sm:$0xf]
      %v1121 = vld [vmem:[%s3 + $0x38] sm:$0xf]
      %v1122 = vld [vmem:[%s3 + $0x3c] sm:$0xf]
      %v1123 = vld [vmem:[%s4] sm:$0x1]
      %v1125 = vlaneseq
      %v1126 = vshrl.u32 %v1125, 7
      %v1127 = vsub.s32 0, %v1126
      %v1128 = vrot.slane %v1123, %v1127
      %v1146 = vunpack.c.l.b16 %v1107
      %v1147 = vunpack.c.l.b16 %v1108
      %v1148 = vunpack.c.l.b16 %v1109
      %v1149 = vunpack.c.l.b16 %v1110
      %v1150 = vunpack.c.l.b16 %v1111
      %v1151 = vunpack.c.l.b16 %v1112
      %v1152 = vunpack.c.l.b16 %v1113
      %v1153 = vunpack.c.l.b16 %v1114
      %v1154 = vunpack.c.l.b16 %v1115
      %v1155 = vunpack.c.l.b16 %v1116
      %v1156 = vunpack.c.l.b16 %v1117
      %v1157 = vunpack.c.l.b16 %v1118
      %v1158 = vunpack.c.l.b16 %v1119
      %v1159 = vunpack.c.l.b16 %v1120
      %v1160 = vunpack.c.l.b16 %v1121
      %v1161 = vunpack.c.l.b16 %v1122
      %v1162 = vpack.c.b16 %v1147, %v1146
      %v1163 = vpack.c.b16 %v1149, %v1148
      %v1164 = vpack.c.b16 %v1151, %v1150
      %v1165 = vpack.c.b16 %v1153, %v1152
      %v1166 = vpack.c.b16 %v1155, %v1154
      %v1167 = vpack.c.b16 %v1157, %v1156
      %v1168 = vpack.c.b16 %v1159, %v1158
      %v1169 = vpack.c.b16 %v1161, %v1160
      %1178 = vmatprep.subr.bf16.mxu0 0
      %1179 = vmatpush1.bf16.msra.mxu0 %v1169
      %1180 = vmatprep.subr.bf16.mxu0 0
      %1181 = vmatpush1.bf16.msra.mxu0 %v1168
      %1182 = vmatprep.subr.bf16.mxu0 0
      %1183 = vmatpush1.bf16.msra.mxu0 %v1167
      %1184 = vmatprep.subr.bf16.mxu0 0
      %1185 = vmatpush1.bf16.msra.mxu0 %v1166
      %1186 = vmatprep.subr.bf16.mxu0 0
      %1187 = vmatpush1.bf16.msra.mxu0 %v1165
      %1188 = vmatprep.subr.bf16.mxu0 0
      %1189 = vmatpush1.bf16.msra.mxu0 %v1164
      %1190 = vmatprep.subr.bf16.mxu0 0
      %1191 = vmatpush1.bf16.msra.mxu0 %v1163
      %1192 = vmatprep.subr.bf16.mxu0 0
      %1193 = vmatpush1.bf16.msra.mxu0 %v1162
      %1194 = vmatprep.subr.bf16.mxu0 0
      %1195 = vmatpush2.bf16.msra.mxu0 0
      %1196 = vmatprep.subr.bf16.mxu0 0
      %1197 = vmatpush2.bf16.msra.mxu0 0
      %1198 = vmatprep.subr.bf16.mxu0 0
      %1199 = vmatpush2.bf16.msra.mxu0 0
      %1200 = vmatprep.subr.bf16.mxu0 0
      %1201 = vmatpush2.bf16.msra.mxu0 0
      %1202 = vmatprep.subr.bf16.mxu0 0
      %1203 = vmatpush2.bf16.msra.mxu0 0
      %1204 = vmatprep.subr.bf16.mxu0 0
      %1205 = vmatpush2.bf16.msra.mxu0 0
      %1206 = vmatprep.subr.bf16.mxu0 0
      %1207 = vmatpush2.bf16.msra.mxu0 0
      %1208 = vmatprep.subr.bf16.mxu0 0
      %1209 = vmatpush2.bf16.msra.mxu0 0
      %1210 = vmatprep.mubr.bf16.mxu0 0
      %1211 = vmatmul.mubr.bf16.gmra.mxu0 %v1099
      %v1212 = vpop.f32.mrf.mxu0
      %v1213 = vadd.f32 %v1128, %v1212
      %v1214 = vpop.f32.mrf.mxu0
      %v1215 = vpop.f32.mrf.mxu0
      %v1216 = vadd.f32 %v1128, %v1215
      %v1217 = vpop.f32.mrf.mxu0
      %1218 = vmatprep.mubr.bf16.mxu0 0
      %1219 = vmatmul.mubr.bf16.gmra.mxu0 %v1100
      %v1220 = vpop.f32.mrf.mxu0
      %v1221 = vadd.f32 %v1128, %v1220
      %v1222 = vpop.f32.mrf.mxu0
      %v1223 = vpop.f32.mrf.mxu0
      %v1224 = vadd.f32 %v1128, %v1223
      %v1225 = vpop.f32.mrf.mxu0
      %1226 = vmatprep.mubr.bf16.mxu0 0
      %1227 = vmatmul.mubr.bf16.gmra.mxu0 %v1101
      %v1228 = vpop.f32.mrf.mxu0
      %v1229 = vadd.f32 %v1128, %v1228
      %v1230 = vpop.f32.mrf.mxu0
      %v1231 = vpop.f32.mrf.mxu0
      %v1232 = vadd.f32 %v1128, %v1231
      %v1233 = vpop.f32.mrf.mxu0
      %1234 = vmatprep.mubr.bf16.mxu0 0
      %1235 = vmatmul.mubr.bf16.gmra.mxu0 %v1102
      %v1236 = vpop.f32.mrf.mxu0
      %v1237 = vadd.f32 %v1128, %v1236
      %v1238 = vpop.f32.mrf.mxu0
      %v1239 = vpop.f32.mrf.mxu0
      %v1240 = vadd.f32 %v1128, %v1239
      %v1241 = vpop.f32.mrf.mxu0
      %1242 = vmatprep.mubr.bf16.mxu0 0
      %1243 = vmatmul.mubr.bf16.gmra.mxu0 %v1103
      %v1244 = vpop.f32.mrf.mxu0
      %v1245 = vadd.f32 %v1128, %v1244
      %v1246 = vpop.f32.mrf.mxu0
      %v1247 = vpop.f32.mrf.mxu0
      %v1248 = vadd.f32 %v1128, %v1247
      %v1249 = vpop.f32.mrf.mxu0
      %1250 = vmatprep.mubr.bf16.mxu0 0
      %1251 = vmatmul.mubr.bf16.gmra.mxu0 %v1104
      %v1252 = vpop.f32.mrf.mxu0
      %v1253 = vadd.f32 %v1128, %v1252
      %v1254 = vpop.f32.mrf.mxu0
      %v1255 = vpop.f32.mrf.mxu0
      %v1256 = vadd.f32 %v1128, %v1255
      %v1257 = vpop.f32.mrf.mxu0
      %1258 = vmatprep.mubr.bf16.mxu0 0
      %1259 = vmatmul.mubr.bf16.gmra.mxu0 %v1105
      %v1260 = vpop.f32.mrf.mxu0
      %v1261 = vadd.f32 %v1128, %v1260
      %v1262 = vpop.f32.mrf.mxu0
      %v1263 = vpop.f32.mrf.mxu0
      %v1264 = vadd.f32 %v1128, %v1263
      %v1265 = vpop.f32.mrf.mxu0
      %1266 = vmatprep.mubr.bf16.mxu0 0
      %1267 = vmatmul.mubr.bf16.gmra.mxu0 %v1106
      %v1268 = vpop.f32.mrf.mxu0
      %v1269 = vadd.f32 %v1128, %v1268
      %v1270 = vpop.f32.mrf.mxu0
      %v1271 = vpop.f32.mrf.mxu0
      %v1272 = vadd.f32 %v1128, %v1271
      %v1273 = vpop.f32.mrf.mxu0
      %1274 = vdwg.mxu0
      %v1275 = vadd.f32 %v1213, %v650
      %v1276 = vadd.f32 %v1216, %v651
      %v1277 = vadd.f32 %v1221, %v652
      %v1278 = vadd.f32 %v1224, %v653
      %v1279 = vadd.f32 %v1229, %v654
      %v1280 = vadd.f32 %v1232, %v655
      %v1281 = vadd.f32 %v1237, %v656
      %v1282 = vadd.f32 %v1240, %v657
      %v1283 = vadd.f32 %v1245, %v658
      %v1284 = vadd.f32 %v1248, %v659
      %v1285 = vadd.f32 %v1253, %v660
      %v1286 = vadd.f32 %v1256, %v661
      %v1287 = vadd.f32 %v1261, %v662
      %v1288 = vadd.f32 %v1264, %v663
      %v1289 = vadd.f32 %v1269, %v664
      %v1290 = vadd.f32 %v1272, %v665
      %vm1291 = vcmp.ge.f32.partialorder %v1275, 0.0
      %vm1292 = vcmp.ge.f32.partialorder %v1276, 0.0
      %vm1293 = vcmp.ge.f32.partialorder %v1277, 0.0
      %vm1294 = vcmp.ge.f32.partialorder %v1278, 0.0
      %vm1295 = vcmp.ge.f32.partialorder %v1279, 0.0
      %vm1296 = vcmp.ge.f32.partialorder %v1280, 0.0
      %vm1297 = vcmp.ge.f32.partialorder %v1281, 0.0
      %vm1298 = vcmp.ge.f32.partialorder %v1282, 0.0
      %vm1299 = vcmp.ge.f32.partialorder %v1283, 0.0
      %vm1300 = vcmp.ge.f32.partialorder %v1284, 0.0
      %vm1301 = vcmp.ge.f32.partialorder %v1285, 0.0
      %vm1302 = vcmp.ge.f32.partialorder %v1286, 0.0
      %vm1303 = vcmp.ge.f32.partialorder %v1287, 0.0
      %vm1304 = vcmp.ge.f32.partialorder %v1288, 0.0
      %vm1305 = vcmp.ge.f32.partialorder %v1289, 0.0
      %vm1306 = vcmp.ge.f32.partialorder %v1290, 0.0
      %v1307 = vmul.f32 %v1275, 0.2
      %v1308 = vmul.f32 %v1276, 0.2
      %v1309 = vmul.f32 %v1277, 0.2
      %v1310 = vmul.f32 %v1278, 0.2
      %v1311 = vmul.f32 %v1279, 0.2
      %v1312 = vmul.f32 %v1280, 0.2
      %v1313 = vmul.f32 %v1281, 0.2
      %v1314 = vmul.f32 %v1282, 0.2
      %v1315 = vmul.f32 %v1283, 0.2
      %v1316 = vmul.f32 %v1284, 0.2
      %v1317 = vmul.f32 %v1285, 0.2
      %v1318 = vmul.f32 %v1286, 0.2
      %v1319 = vmul.f32 %v1287, 0.2
      %v1320 = vmul.f32 %v1288, 0.2
      %v1321 = vmul.f32 %v1289, 0.2
      %v1322 = vmul.f32 %v1290, 0.2
      %v1323 = vsel %vm1291, %v1275, %v1307
      %v1324 = vsel %vm1292, %v1276, %v1308
      %v1325 = vsel %vm1293, %v1277, %v1309
      %v1326 = vsel %vm1294, %v1278, %v1310
      %v1327 = vsel %vm1295, %v1279, %v1311
      %v1328 = vsel %vm1296, %v1280, %v1312
      %v1329 = vsel %vm1297, %v1281, %v1313
      %v1330 = vsel %vm1298, %v1282, %v1314
      %v1331 = vsel %vm1299, %v1283, %v1315
      %v1332 = vsel %vm1300, %v1284, %v1316
      %v1333 = vsel %vm1301, %v1285, %v1317
      %v1334 = vsel %vm1302, %v1286, %v1318
      %v1335 = vsel %vm1303, %v1287, %v1319
      %v1336 = vsel %vm1304, %v1288, %v1320
      %v1337 = vsel %vm1305, %v1289, %v1321
      %v1338 = vsel %vm1306, %v1290, %v1322
      %1339 = vst [vmem:[%s200] sm:$0xff] %v1323
      %1340 = vst [vmem:[%s200 + $0x8] sm:$0xff] %v1324
      %1341 = vst [vmem:[%s200 + $0x10] sm:$0xff] %v1325
      %1342 = vst [vmem:[%s200 + $0x18] sm:$0xff] %v1326
      %1343 = vst [vmem:[%s200 + $0x20] sm:$0xff] %v1327
      %1344 = vst [vmem:[%s200 + $0x28] sm:$0xff] %v1328
      %1345 = vst [vmem:[%s200 + $0x30] sm:$0xff] %v1329
      %1346 = vst [vmem:[%s200 + $0x38] sm:$0xff] %v1330
      %1347 = vst [vmem:[%s200 + $0x40] sm:$0xff] %v1331
      %1348 = vst [vmem:[%s200 + $0x48] sm:$0xff] %v1332
      %1349 = vst [vmem:[%s200 + $0x50] sm:$0xff] %v1333
      %1350 = vst [vmem:[%s200 + $0x58] sm:$0xff] %v1334
      %1351 = vst [vmem:[%s200 + $0x60] sm:$0xff] %v1335
      %1352 = vst [vmem:[%s200 + $0x68] sm:$0xff] %v1336
      %1353 = vst [vmem:[%s200 + $0x70] sm:$0xff] %v1337
      %1354 = vst [vmem:[%s200 + $0x78] sm:$0xff] %v1338
      %s1355 = smul.u32 16, %s21
      %p1356 = scmp.lt.s32.totalorder %s20, 1
      %s1357 = scalar_select %p1356, %s20, 1
      %p1358 = scmp.lt.s32.totalorder %s1355, 63
      %s1359 = scalar_select %p1358, %s1355, 63
      %s1360 = smul.addr %s1357, 64
      %s1361 = sadd.s32 %s1359, %s1360
      %s1362 = smul.addr %s1361, 8
      %s1363 = scalar_lea.vmem %s5, %s1362
      // Predicated region
      $region265: #{dilated_block.1} parent=35 // pred_check
        %p1364 = pneg %p132
      $region266: #{dilated_block.1} parent=35 // pred_check_branch
        %1366 = sbr.rel (%p1364) target = $region268
      $region267: #{dilated_block.1} parent=35 // pred_region
        %s1367 = smul.u32 16, %s21
      $region268: #{dilated_block.1} parent=35 // pred_fallthru
        _
    $region36: #{dilated_block.1} parent=5 // pred_fallthru
      _
    %p1368 = scmp.le.s32.totalorder 2, %s11
    // Predicated region
    $region269: #{dilated_block.1} parent=5 // pred_check
      %p1369 = pneg %p1368
    $region270: #{dilated_block.1} parent=5 // pred_check_branch
      %1371 = sbr.rel (%p1369) target = $region272
    $region271: #{dilated_block.1} parent=5 // pred_region
      %s1372 = ssub.s32 %s11, 2
      // Predicated region
      $region273: #{dilated_block.1} parent=271 // pred_check
        %p1373 = pneg %p138
      $region274: #{dilated_block.1} parent=271 // pred_check_branch
        %1375 = sbr.rel (%p1373) target = $region276
      $region275: #{dilated_block.1} parent=271 // pred_region
        %s1376 = smul.u32 16, %s23
        %p1377 = scmp.lt.s32.totalorder %s22, 1
        %s1378 = scalar_select %p1377, %s22, 1
        %p1379 = scmp.lt.s32.totalorder %s1376, 63
        %s1380 = scalar_select %p1379, %s1376, 63
        %s1381 = smul.addr %s1378, 64
        %s1382 = sadd.s32 %s1380, %s1381
        %s1383 = smul.addr %s1382, 8
        %s1384 = scalar_lea.vmem %s5, %s1383
      $region276: #{dilated_block.1} parent=271 // pred_fallthru
        _
    $region272: #{dilated_block.1} parent=5 // pred_fallthru
      _
  $region6: #{dilated_block.1} parent=0 // loop_footer
    %s15 = sadd.s32 1, %s11
  $region7: #{dilated_block.1} parent=0 // loop_footer_branch
    %10 = sbr.rel target = $region3
  $region8: #{dilated_block.1} parent=0 // loop_exit
    _
  %1385 = vsyncmov [#allocation3]
  %s1386 = vpop.sfrf %1385
  %p1387 = scmp.eq.s32.totalorder %s1386, 0
  %p1388 = pneg %p1387
  %1390 = shalt.err (%p1388)
  %s1391 = scalar_lea.sflag [#allocation3], 1
  %1392 = vsyncmov %s1391
  %s1393 = vpop.sfrf %1392
  %p1394 = scmp.eq.s32.totalorder %s1393, 0
  %p1395 = pneg %p1394
  %1397 = shalt.err (%p1395)
  %s1398 = scalar_lea.sflag [#allocation3], 2
  %1399 = vsyncmov %s1398
  %s1400 = vpop.sfrf %1399
  %p1401 = scmp.eq.s32.totalorder %s1400, 0
  %p1402 = pneg %p1401
  %1404 = shalt.err (%p1402)
  %s1405 = scalar_lea.sflag [#allocation3], 3
  %1406 = vsyncmov %s1405
  %s1407 = vpop.sfrf %1406
  %p1408 = scmp.eq.s32.totalorder %s1407, 0
  %p1409 = pneg %p1408
  %1411 = shalt.err (%p1409)
  %s1412 = scalar_lea.sflag [#allocation3], 4
  %1413 = vsyncmov %s1412
  %s1414 = vpop.sfrf %1413
  %p1415 = scmp.eq.s32.totalorder %s1414, 0
  %p1416 = pneg %p1415
  %1418 = shalt.err (%p1416)
  %s1419 = scalar_lea.sflag [#allocation3], 5
  %1420 = vsyncmov %s1419
  %s1421 = vpop.sfrf %1420
  %p1422 = scmp.eq.s32.totalorder %s1421, 0
  %p1423 = pneg %p1422
  %1425 = shalt.err (%p1423)

</llo_original>
